<compile_context>
chip_gen: v5e
topology: v5e:2x2
jax: 0.10.0
libtpu: 0.0.40
codegen_flags: <defaults>
</compile_context>

<pallas_src>
import math
from functools import partial

import jax
import jax.numpy as jnp
from jax.experimental import pallas as pl
from jax.experimental.pallas import tpu as pltpu


# ------------------------------ fused kernel --------------------------------

def _fused_mha_kernel(x_ref, w_in_ref, b_in_ref, w_out_ref, b_out_ref, o_ref,
                      *, num_heads):
    """Fused in-proj + multi-head SDPA + out-proj for ONE parallel module.

    Block shapes seen by this kernel:
      x_ref     : (1, B, S, E)  f32
      w_in_ref  : (1, E, 3E)    bf16  (pre-transposed, Q rows pre-scaled)
      b_in_ref  : (1, 1, 3E)    f32   (Q part pre-scaled)
      w_out_ref : (1, E, E)     bf16  (pre-transposed: (in_features, out_features))
      b_out_ref : (1, 1, E)     f32
      o_ref     : (1, B, S, E)  f32
    """
    x = x_ref[0]          # (B, S, E)
    w_in = w_in_ref[0]    # (E, 3E)
    b_in = b_in_ref[0]    # (1, 3E)
    w_out = w_out_ref[0]  # (E, E)
    b_out = b_out_ref[0]  # (1, E)

    B, S, E = x.shape
    Dh = E // num_heads

    # In-projection on the whole (B*S, E) token slab: bf16 operands, f32 acc.
    xf = x.reshape(B * S, E).astype(jnp.bfloat16)
    qkv = jnp.dot(xf, w_in, preferred_element_type=jnp.float32) + b_in   # (B*S, 3E) f32
    qkv = qkv.astype(jnp.bfloat16).reshape(B, S, 3 * E)

    # Per-head attention, accumulated directly into the out-projection.
    out_acc = jnp.zeros((B * S, E), jnp.float32)
    for h in range(num_heads):
        lo = h * Dh
        qh = qkv[:, :, lo:lo + Dh]                         # (B, S, Dh)  (scale folded in)
        kh = qkv[:, :, E + lo:E + lo + Dh]                 # (B, S, Dh)
        vh = qkv[:, :, 2 * E + lo:2 * E + lo + Dh]         # (B, S, Dh)

        s = jnp.einsum("bqd,bkd->bqk", qh, kh,
                       preferred_element_type=jnp.float32)                # (B, S, S) f32
        m = jnp.max(s, axis=-1, keepdims=True)
        p = jnp.exp(s - m)                                                 # f32
        denom = jnp.sum(p, axis=-1, keepdims=True)                         # (B, S, 1)
        oh = jnp.einsum("bqk,bkd->bqd", p.astype(jnp.bfloat16), vh,
                        preferred_element_type=jnp.float32)                # (B, S, Dh)
        oh = oh * pl.reciprocal(denom)   # exact reciprocal (f32 softmax math)

        # Accumulate this head's contribution to the out-projection.
        out_acc = out_acc + jnp.dot(
            oh.reshape(B * S, Dh).astype(jnp.bfloat16),
            w_out[lo:lo + Dh, :],
            preferred_element_type=jnp.float32)                            # (B*S, E)

    o_ref[0] = (out_acc + b_out).reshape(B, S, E)


# --------------------------- module forward wrapper --------------------------

def multihead_attention_parallel(x_parallel, params, num_heads):
    """Equivalent of MultiHeadAttentionParallel.forward (eval mode, no masks).

    x_parallel : list (len P) of (S, B, E) float32 arrays (torch default layout).
    params     : stacked torch-layout weights (w_in (P,3E,E), b_in (P,3E),
                                               w_out (P,E,E), b_out (P,E)).
    Returns a list (len P) of (S, B, E) float32 arrays.
    """
    w_in, b_in, w_out, b_out = params
    P = len(x_parallel)
    S, B, E = x_parallel[0].shape
    scale = 1.0 / math.sqrt(E // num_heads)

    # Parameter prep (once, outside the kernel):
    #   * fold 1/sqrt(Dh) into the Q rows of the in-projection,
    #   * pre-transpose both weights to (in_features, out_features) so the
    #     kernel issues plain A@B matmuls (no in-kernel weight transposes),
    #   * store weight copies as bf16 (biases stay f32).
    scale_vec = jnp.where(jnp.arange(3 * E) < E, scale, 1.0).astype(jnp.float32)
    w_in_p = jnp.transpose(w_in * scale_vec[None, :, None], (0, 2, 1)).astype(jnp.bfloat16)
    b_in_p = (b_in * scale_vec[None, :])[:, None, :]                   # (P, 1, 3E) f32
    w_out_p = jnp.transpose(w_out, (0, 2, 1)).astype(jnp.bfloat16)     # (P, E, E) bf16
    b_out_p = b_out[:, None, :]                                        # (P, 1, E)  f32

    # Batch-major activation slab (P, B, S, E).
    x = jnp.transpose(jnp.stack(x_parallel, axis=0), (0, 2, 1, 3))

    out = pl.pallas_call(
        partial(_fused_mha_kernel, num_heads=num_heads),
        out_shape=jax.ShapeDtypeStruct((P, B, S, E), jnp.float32),
        grid=(P,),
        in_specs=[
            pl.BlockSpec((1, B, S, E), lambda p: (p, 0, 0, 0)),        # x
            pl.BlockSpec((1, E, 3 * E), lambda p: (p, 0, 0)),          # w_in (pre-T, scaled)
            pl.BlockSpec((1, 1, 3 * E), lambda p: (p, 0, 0)),          # b_in
            pl.BlockSpec((1, E, E), lambda p: (p, 0, 0)),              # w_out (pre-T)
            pl.BlockSpec((1, 1, E), lambda p: (p, 0, 0)),              # b_out
        ],
        out_specs=pl.BlockSpec((1, B, S, E), lambda p: (p, 0, 0, 0)),
        compiler_params=pltpu.CompilerParams(
            dimension_semantics=("parallel",),        # P>=2 steps shard across v7x's 2 TCs
            vmem_limit_bytes=32 * 1024 * 1024,        # explicit VMEM budget
        ),
    )(x, w_in_p, b_in_p, w_out_p, b_out_p)

    out = jnp.transpose(out, (0, 2, 1, 3))            # back to (P, S, B, E)
    return [out[i] for i in range(P)]


# ------------------------------ params / reference ---------------------------

def init_mha_params(key, embed_dim, num_parallel):
    """Deterministic synthetic parameters (stacked across parallel modules)."""
    k1, k2, k3, k4 = jax.random.split(key, 4)
    w_in = jax.random.normal(
        k1, (num_parallel, 3 * embed_dim, embed_dim), jnp.float32) * 0.05
    b_in = jax.random.normal(k3, (num_parallel, 3 * embed_dim), jnp.float32) * 0.02
    w_out = jax.random.normal(
        k2, (num_parallel, embed_dim, embed_dim), jnp.float32) * 0.05
    b_out = jax.random.normal(k4, (num_parallel, embed_dim), jnp.float32) * 0.02
    return w_in, b_in, w_out, b_out


def _reference_mha(x, w_in, b_in, w_out, b_out, num_heads):
    """Pure-JAX f32 reference matching torch nn.MultiheadAttention (eval, no mask)."""
    S, B, E = x.shape
    Dh = E // num_heads
    qkv = x @ w_in.T + b_in                                   # (S, B, 3E)
    q, k, v = jnp.split(qkv, 3, axis=-1)

    def heads(t):
        return t.reshape(S, B, num_heads, Dh).transpose(1, 2, 0, 3)  # (B,H,S,Dh)

    qh, kh, vh = heads(q), heads(k), heads(v)
    s = jnp.einsum("bhqd,bhkd->bhqk", qh, kh) / math.sqrt(Dh)
    p = jax.nn.softmax(s, axis=-1)
    o = jnp.einsum("bhqk,bhkd->bhqd", p, vh)                  # (B,H,S,Dh)
    o = o.transpose(2, 0, 1, 3).reshape(S, B, E)
    return o @ w_out.T + b_out


# ----------------------------------- main ------------------------------------

if __name__ == "__main__":
    S, B, E = 8, 2, 128        # seq_len, batch, embed_dim (E multiple of 128 = lane-dense)
    num_heads = 4
    num_parallel = 2

    key = jax.random.PRNGKey(0)
    kx, kp = jax.random.split(key)
    x_parallel = [
        jax.random.normal(jax.random.fold_in(kx, i), (S, B, E), jnp.float32)
        for i in range(num_parallel)
    ]
    params = init_mha_params(kp, E, num_parallel)

    outs = multihead_attention_parallel(x_parallel, params, num_heads)
    outs = [jax.block_until_ready(o) for o in outs]

    assert len(outs) == num_parallel
    w_in, b_in, w_out, b_out = params
    for i, o in enumerate(outs):
        assert o.shape == (S, B, E) and o.dtype == jnp.float32
        assert bool(jnp.all(jnp.isfinite(o)))
        ref = _reference_mha(x_parallel[i], w_in[i], b_in[i],
                             w_out[i], b_out[i], num_heads)
        # bf16 MXU operands (f32 accumulation / f32 softmax) -> slightly looser
        # tolerance than the pure-f32 path.
        assert bool(jnp.allclose(o, ref, rtol=3e-2, atol=3e-2)), (
            f"mismatch vs reference for module {i}: "
            f"max abs err {float(jnp.max(jnp.abs(o - ref)))}")
    print("KERNEL_OK")
</pallas_src>

<mosaic_0001>
module attributes {stable_mosaic.version = 11 : i64} {
  func.func @_fused_mha_kernel(%arg0: i32, %arg1: memref<1x2x8x128xf32, #tpu.memory_space<vmem>>, %arg2: memref<1x128x384xbf16, #tpu.memory_space<vmem>>, %arg3: memref<1x1x384xf32, #tpu.memory_space<vmem>>, %arg4: memref<1x128x128xbf16, #tpu.memory_space<vmem>>, %arg5: memref<1x1x128xf32, #tpu.memory_space<vmem>>, %arg6: memref<1x2x8x128xf32, #tpu.memory_space<vmem>>) attributes {dimension_semantics = [#tpu.dimension_semantics<parallel>], iteration_bounds = array<i64: 2>, scalar_prefetch = 0 : i64, scratch_operands = 0 : i64, tpu.core_type = #tpu.core_type<tc>, window_params = [{transform_indices = @transform_0, window_bounds = array<i64: 1, 2, 8, 128>}, {transform_indices = @transform_1, window_bounds = array<i64: 1, 128, 384>}, {transform_indices = @transform_2, window_bounds = array<i64: 1, 1, 384>}, {transform_indices = @transform_3, window_bounds = array<i64: 1, 128, 128>}, {transform_indices = @transform_4, window_bounds = array<i64: 1, 1, 128>}, {transform_indices = @transform_5, window_bounds = array<i64: 1, 2, 8, 128>}]} {
    %c0 = arith.constant 0 : index
    %c0_0 = arith.constant 0 : index
    %c0_1 = arith.constant 0 : index
    %c0_2 = arith.constant 0 : index
    %0 = vector.load %arg1[%c0, %c0_0, %c0_1, %c0_2] : memref<1x2x8x128xf32, #tpu.memory_space<vmem>>, vector<1x2x8x128xf32>
    %1 = vector.shape_cast %0 : vector<1x2x8x128xf32> to vector<2x8x128xf32>
    %c0_3 = arith.constant 0 : index
    %c0_4 = arith.constant 0 : index
    %c0_5 = arith.constant 0 : index
    %2 = vector.load %arg2[%c0_3, %c0_4, %c0_5] : memref<1x128x384xbf16, #tpu.memory_space<vmem>>, vector<1x128x384xbf16>
    %3 = vector.shape_cast %2 : vector<1x128x384xbf16> to vector<128x384xbf16>
    %c0_6 = arith.constant 0 : index
    %c0_7 = arith.constant 0 : index
    %c0_8 = arith.constant 0 : index
    %4 = vector.load %arg3[%c0_6, %c0_7, %c0_8] : memref<1x1x384xf32, #tpu.memory_space<vmem>>, vector<1x1x384xf32>
    %5 = vector.shape_cast %4 : vector<1x1x384xf32> to vector<1x384xf32>
    %c0_9 = arith.constant 0 : index
    %c0_10 = arith.constant 0 : index
    %c0_11 = arith.constant 0 : index
    %6 = vector.load %arg4[%c0_9, %c0_10, %c0_11] : memref<1x128x128xbf16, #tpu.memory_space<vmem>>, vector<1x128x128xbf16>
    %7 = vector.shape_cast %6 : vector<1x128x128xbf16> to vector<128x128xbf16>
    %c0_12 = arith.constant 0 : index
    %c0_13 = arith.constant 0 : index
    %c0_14 = arith.constant 0 : index
    %8 = vector.load %arg5[%c0_12, %c0_13, %c0_14] : memref<1x1x128xf32, #tpu.memory_space<vmem>>, vector<1x1x128xf32>
    %9 = vector.shape_cast %8 : vector<1x1x128xf32> to vector<1x128xf32>
    %10 = vector.shape_cast %1 : vector<2x8x128xf32> to vector<16x128xf32>
    %11 = arith.truncf %10 : vector<16x128xf32> to vector<16x128xbf16>
    %cst = arith.constant dense<0.000000e+00> : vector<16x384xf32>
    %12 = tpu.matmul %11, %3, %cst {dimension_numbers = #tpu.dot_dimension_numbers<[1], [0], [0], [1], [0, 0, 1, 1], [], []>} : vector<16x128xbf16>, vector<128x384xbf16>, vector<16x384xf32> -> vector<16x384xf32>
    %13 = vector.broadcast %5 : vector<1x384xf32> to vector<16x384xf32>
    %14 = arith.addf %12, %13 : vector<16x384xf32>
    %15 = arith.truncf %14 : vector<16x384xf32> to vector<16x384xbf16>
    %16 = vector.shape_cast %15 : vector<16x384xbf16> to vector<2x8x384xbf16>
    %cst_15 = arith.constant 0.000000e+00 : f32
    %17 = vector.broadcast %cst_15 : f32 to vector<16x128xf32>
    %18 = vector.extract_strided_slice %16 {offsets = [0, 0, 0], sizes = [2, 8, 32], strides = [1, 1, 1]} : vector<2x8x384xbf16> to vector<2x8x32xbf16>
    %19 = vector.extract_strided_slice %16 {offsets = [0, 0, 128], sizes = [2, 8, 32], strides = [1, 1, 1]} : vector<2x8x384xbf16> to vector<2x8x32xbf16>
    %20 = vector.extract_strided_slice %16 {offsets = [0, 0, 256], sizes = [2, 8, 32], strides = [1, 1, 1]} : vector<2x8x384xbf16> to vector<2x8x32xbf16>
    "tpu.trace_start"() <{level = 10 : i32, message = "bqd,bkd->bqk"}> : () -> ()
    %cst_16 = arith.constant dense<0.000000e+00> : vector<2x8x8xf32>
    %21 = tpu.matmul %18, %19, %cst_16 {dimension_numbers = #tpu.dot_dimension_numbers<[2], [2], [1], [1], [0, 0, 0, 1, 1, 1], [0], [0]>} : vector<2x8x32xbf16>, vector<2x8x32xbf16>, vector<2x8x8xf32> -> vector<2x8x8xf32>
    "tpu.trace_stop"() : () -> ()
    %cst_17 = arith.constant dense<0xFF800000> : vector<2x8xf32>
    %22 = vector.multi_reduction <maximumf>, %21, %cst_17 [2] : vector<2x8x8xf32> to vector<2x8xf32>
    %23 = vector.shape_cast %22 : vector<2x8xf32> to vector<2x8x1xf32>
    %24 = vector.broadcast %23 : vector<2x8x1xf32> to vector<2x8x8xf32>
    %25 = arith.subf %21, %24 : vector<2x8x8xf32>
    %26 = math.exp %25 : vector<2x8x8xf32>
    %cst_18 = arith.constant dense<0.000000e+00> : vector<2x8xf32>
    %27 = vector.multi_reduction <add>, %26, %cst_18 [2] : vector<2x8x8xf32> to vector<2x8xf32>
    %28 = vector.shape_cast %27 : vector<2x8xf32> to vector<2x8x1xf32>
    %29 = arith.truncf %26 : vector<2x8x8xf32> to vector<2x8x8xbf16>
    "tpu.trace_start"() <{level = 10 : i32, message = "bqk,bkd->bqd"}> : () -> ()
    %cst_19 = arith.constant dense<0.000000e+00> : vector<2x8x32xf32>
    %30 = tpu.matmul %29, %20, %cst_19 {dimension_numbers = #tpu.dot_dimension_numbers<[2], [1], [1], [2], [0, 0, 0, 1, 1, 2], [0], [0]>} : vector<2x8x8xbf16>, vector<2x8x32xbf16>, vector<2x8x32xf32> -> vector<2x8x32xf32>
    "tpu.trace_stop"() : () -> ()
    %31 = tpu.reciprocal %28 : vector<2x8x1xf32> -> vector<2x8x1xf32>
    %32 = vector.broadcast %31 : vector<2x8x1xf32> to vector<2x8x32xf32>
    %33 = arith.mulf %30, %32 : vector<2x8x32xf32>
    %34 = vector.shape_cast %33 : vector<2x8x32xf32> to vector<16x32xf32>
    %35 = arith.truncf %34 : vector<16x32xf32> to vector<16x32xbf16>
    %36 = vector.extract_strided_slice %7 {offsets = [0, 0], sizes = [32, 128], strides = [1, 1]} : vector<128x128xbf16> to vector<32x128xbf16>
    %cst_20 = arith.constant dense<0.000000e+00> : vector<16x128xf32>
    %37 = tpu.matmul %35, %36, %cst_20 {dimension_numbers = #tpu.dot_dimension_numbers<[1], [0], [0], [1], [0, 0, 1, 1], [], []>} : vector<16x32xbf16>, vector<32x128xbf16>, vector<16x128xf32> -> vector<16x128xf32>
    %38 = arith.addf %17, %37 : vector<16x128xf32>
    %39 = vector.extract_strided_slice %16 {offsets = [0, 0, 32], sizes = [2, 8, 32], strides = [1, 1, 1]} : vector<2x8x384xbf16> to vector<2x8x32xbf16>
    %40 = vector.extract_strided_slice %16 {offsets = [0, 0, 160], sizes = [2, 8, 32], strides = [1, 1, 1]} : vector<2x8x384xbf16> to vector<2x8x32xbf16>
    %41 = vector.extract_strided_slice %16 {offsets = [0, 0, 288], sizes = [2, 8, 32], strides = [1, 1, 1]} : vector<2x8x384xbf16> to vector<2x8x32xbf16>
    "tpu.trace_start"() <{level = 10 : i32, message = "bqd,bkd->bqk"}> : () -> ()
    %cst_21 = arith.constant dense<0.000000e+00> : vector<2x8x8xf32>
    %42 = tpu.matmul %39, %40, %cst_21 {dimension_numbers = #tpu.dot_dimension_numbers<[2], [2], [1], [1], [0, 0, 0, 1, 1, 1], [0], [0]>} : vector<2x8x32xbf16>, vector<2x8x32xbf16>, vector<2x8x8xf32> -> vector<2x8x8xf32>
    "tpu.trace_stop"() : () -> ()
    %cst_22 = arith.constant dense<0xFF800000> : vector<2x8xf32>
    %43 = vector.multi_reduction <maximumf>, %42, %cst_22 [2] : vector<2x8x8xf32> to vector<2x8xf32>
    %44 = vector.shape_cast %43 : vector<2x8xf32> to vector<2x8x1xf32>
    %45 = vector.broadcast %44 : vector<2x8x1xf32> to vector<2x8x8xf32>
    %46 = arith.subf %42, %45 : vector<2x8x8xf32>
    %47 = math.exp %46 : vector<2x8x8xf32>
    %cst_23 = arith.constant dense<0.000000e+00> : vector<2x8xf32>
    %48 = vector.multi_reduction <add>, %47, %cst_23 [2] : vector<2x8x8xf32> to vector<2x8xf32>
    %49 = vector.shape_cast %48 : vector<2x8xf32> to vector<2x8x1xf32>
    %50 = arith.truncf %47 : vector<2x8x8xf32> to vector<2x8x8xbf16>
    "tpu.trace_start"() <{level = 10 : i32, message = "bqk,bkd->bqd"}> : () -> ()
    %cst_24 = arith.constant dense<0.000000e+00> : vector<2x8x32xf32>
    %51 = tpu.matmul %50, %41, %cst_24 {dimension_numbers = #tpu.dot_dimension_numbers<[2], [1], [1], [2], [0, 0, 0, 1, 1, 2], [0], [0]>} : vector<2x8x8xbf16>, vector<2x8x32xbf16>, vector<2x8x32xf32> -> vector<2x8x32xf32>
    "tpu.trace_stop"() : () -> ()
    %52 = tpu.reciprocal %49 : vector<2x8x1xf32> -> vector<2x8x1xf32>
    %53 = vector.broadcast %52 : vector<2x8x1xf32> to vector<2x8x32xf32>
    %54 = arith.mulf %51, %53 : vector<2x8x32xf32>
    %55 = vector.shape_cast %54 : vector<2x8x32xf32> to vector<16x32xf32>
    %56 = arith.truncf %55 : vector<16x32xf32> to vector<16x32xbf16>
    %57 = vector.extract_strided_slice %7 {offsets = [32, 0], sizes = [32, 128], strides = [1, 1]} : vector<128x128xbf16> to vector<32x128xbf16>
    %cst_25 = arith.constant dense<0.000000e+00> : vector<16x128xf32>
    %58 = tpu.matmul %56, %57, %cst_25 {dimension_numbers = #tpu.dot_dimension_numbers<[1], [0], [0], [1], [0, 0, 1, 1], [], []>} : vector<16x32xbf16>, vector<32x128xbf16>, vector<16x128xf32> -> vector<16x128xf32>
    %59 = arith.addf %38, %58 : vector<16x128xf32>
    %60 = vector.extract_strided_slice %16 {offsets = [0, 0, 64], sizes = [2, 8, 32], strides = [1, 1, 1]} : vector<2x8x384xbf16> to vector<2x8x32xbf16>
    %61 = vector.extract_strided_slice %16 {offsets = [0, 0, 192], sizes = [2, 8, 32], strides = [1, 1, 1]} : vector<2x8x384xbf16> to vector<2x8x32xbf16>
    %62 = vector.extract_strided_slice %16 {offsets = [0, 0, 320], sizes = [2, 8, 32], strides = [1, 1, 1]} : vector<2x8x384xbf16> to vector<2x8x32xbf16>
    "tpu.trace_start"() <{level = 10 : i32, message = "bqd,bkd->bqk"}> : () -> ()
    %cst_26 = arith.constant dense<0.000000e+00> : vector<2x8x8xf32>
    %63 = tpu.matmul %60, %61, %cst_26 {dimension_numbers = #tpu.dot_dimension_numbers<[2], [2], [1], [1], [0, 0, 0, 1, 1, 1], [0], [0]>} : vector<2x8x32xbf16>, vector<2x8x32xbf16>, vector<2x8x8xf32> -> vector<2x8x8xf32>
    "tpu.trace_stop"() : () -> ()
    %cst_27 = arith.constant dense<0xFF800000> : vector<2x8xf32>
    %64 = vector.multi_reduction <maximumf>, %63, %cst_27 [2] : vector<2x8x8xf32> to vector<2x8xf32>
    %65 = vector.shape_cast %64 : vector<2x8xf32> to vector<2x8x1xf32>
    %66 = vector.broadcast %65 : vector<2x8x1xf32> to vector<2x8x8xf32>
    %67 = arith.subf %63, %66 : vector<2x8x8xf32>
    %68 = math.exp %67 : vector<2x8x8xf32>
    %cst_28 = arith.constant dense<0.000000e+00> : vector<2x8xf32>
    %69 = vector.multi_reduction <add>, %68, %cst_28 [2] : vector<2x8x8xf32> to vector<2x8xf32>
    %70 = vector.shape_cast %69 : vector<2x8xf32> to vector<2x8x1xf32>
    %71 = arith.truncf %68 : vector<2x8x8xf32> to vector<2x8x8xbf16>
    "tpu.trace_start"() <{level = 10 : i32, message = "bqk,bkd->bqd"}> : () -> ()
    %cst_29 = arith.constant dense<0.000000e+00> : vector<2x8x32xf32>
    %72 = tpu.matmul %71, %62, %cst_29 {dimension_numbers = #tpu.dot_dimension_numbers<[2], [1], [1], [2], [0, 0, 0, 1, 1, 2], [0], [0]>} : vector<2x8x8xbf16>, vector<2x8x32xbf16>, vector<2x8x32xf32> -> vector<2x8x32xf32>
    "tpu.trace_stop"() : () -> ()
    %73 = tpu.reciprocal %70 : vector<2x8x1xf32> -> vector<2x8x1xf32>
    %74 = vector.broadcast %73 : vector<2x8x1xf32> to vector<2x8x32xf32>
    %75 = arith.mulf %72, %74 : vector<2x8x32xf32>
    %76 = vector.shape_cast %75 : vector<2x8x32xf32> to vector<16x32xf32>
    %77 = arith.truncf %76 : vector<16x32xf32> to vector<16x32xbf16>
    %78 = vector.extract_strided_slice %7 {offsets = [64, 0], sizes = [32, 128], strides = [1, 1]} : vector<128x128xbf16> to vector<32x128xbf16>
    %cst_30 = arith.constant dense<0.000000e+00> : vector<16x128xf32>
    %79 = tpu.matmul %77, %78, %cst_30 {dimension_numbers = #tpu.dot_dimension_numbers<[1], [0], [0], [1], [0, 0, 1, 1], [], []>} : vector<16x32xbf16>, vector<32x128xbf16>, vector<16x128xf32> -> vector<16x128xf32>
    %80 = arith.addf %59, %79 : vector<16x128xf32>
    %81 = vector.extract_strided_slice %16 {offsets = [0, 0, 96], sizes = [2, 8, 32], strides = [1, 1, 1]} : vector<2x8x384xbf16> to vector<2x8x32xbf16>
    %82 = vector.extract_strided_slice %16 {offsets = [0, 0, 224], sizes = [2, 8, 32], strides = [1, 1, 1]} : vector<2x8x384xbf16> to vector<2x8x32xbf16>
    %83 = vector.extract_strided_slice %16 {offsets = [0, 0, 352], sizes = [2, 8, 32], strides = [1, 1, 1]} : vector<2x8x384xbf16> to vector<2x8x32xbf16>
    "tpu.trace_start"() <{level = 10 : i32, message = "bqd,bkd->bqk"}> : () -> ()
    %cst_31 = arith.constant dense<0.000000e+00> : vector<2x8x8xf32>
    %84 = tpu.matmul %81, %82, %cst_31 {dimension_numbers = #tpu.dot_dimension_numbers<[2], [2], [1], [1], [0, 0, 0, 1, 1, 1], [0], [0]>} : vector<2x8x32xbf16>, vector<2x8x32xbf16>, vector<2x8x8xf32> -> vector<2x8x8xf32>
    "tpu.trace_stop"() : () -> ()
    %cst_32 = arith.constant dense<0xFF800000> : vector<2x8xf32>
    %85 = vector.multi_reduction <maximumf>, %84, %cst_32 [2] : vector<2x8x8xf32> to vector<2x8xf32>
    %86 = vector.shape_cast %85 : vector<2x8xf32> to vector<2x8x1xf32>
    %87 = vector.broadcast %86 : vector<2x8x1xf32> to vector<2x8x8xf32>
    %88 = arith.subf %84, %87 : vector<2x8x8xf32>
    %89 = math.exp %88 : vector<2x8x8xf32>
    %cst_33 = arith.constant dense<0.000000e+00> : vector<2x8xf32>
    %90 = vector.multi_reduction <add>, %89, %cst_33 [2] : vector<2x8x8xf32> to vector<2x8xf32>
    %91 = vector.shape_cast %90 : vector<2x8xf32> to vector<2x8x1xf32>
    %92 = arith.truncf %89 : vector<2x8x8xf32> to vector<2x8x8xbf16>
    "tpu.trace_start"() <{level = 10 : i32, message = "bqk,bkd->bqd"}> : () -> ()
    %cst_34 = arith.constant dense<0.000000e+00> : vector<2x8x32xf32>
    %93 = tpu.matmul %92, %83, %cst_34 {dimension_numbers = #tpu.dot_dimension_numbers<[2], [1], [1], [2], [0, 0, 0, 1, 1, 2], [0], [0]>} : vector<2x8x8xbf16>, vector<2x8x32xbf16>, vector<2x8x32xf32> -> vector<2x8x32xf32>
    "tpu.trace_stop"() : () -> ()
    %94 = tpu.reciprocal %91 : vector<2x8x1xf32> -> vector<2x8x1xf32>
    %95 = vector.broadcast %94 : vector<2x8x1xf32> to vector<2x8x32xf32>
    %96 = arith.mulf %93, %95 : vector<2x8x32xf32>
    %97 = vector.shape_cast %96 : vector<2x8x32xf32> to vector<16x32xf32>
    %98 = arith.truncf %97 : vector<16x32xf32> to vector<16x32xbf16>
    %99 = vector.extract_strided_slice %7 {offsets = [96, 0], sizes = [32, 128], strides = [1, 1]} : vector<128x128xbf16> to vector<32x128xbf16>
    %cst_35 = arith.constant dense<0.000000e+00> : vector<16x128xf32>
    %100 = tpu.matmul %98, %99, %cst_35 {dimension_numbers = #tpu.dot_dimension_numbers<[1], [0], [0], [1], [0, 0, 1, 1], [], []>} : vector<16x32xbf16>, vector<32x128xbf16>, vector<16x128xf32> -> vector<16x128xf32>
    %101 = arith.addf %80, %100 : vector<16x128xf32>
    %102 = vector.broadcast %9 : vector<1x128xf32> to vector<16x128xf32>
    %103 = arith.addf %101, %102 : vector<16x128xf32>
    %104 = vector.shape_cast %103 : vector<16x128xf32> to vector<2x8x128xf32>
    %c0_36 = arith.constant 0 : index
    %c0_37 = arith.constant 0 : index
    %c0_38 = arith.constant 0 : index
    %c0_39 = arith.constant 0 : index
    %105 = vector.load %arg6[%c0_36, %c0_37, %c0_38, %c0_39] : memref<1x2x8x128xf32, #tpu.memory_space<vmem>>, vector<1x2x8x128xf32>
    %106 = vector.shape_cast %105 : vector<1x2x8x128xf32> to vector<2x8x128xf32>
    %107 = vector.shape_cast %104 : vector<2x8x128xf32> to vector<1x2x8x128xf32>
    tpu.vector_store %arg6[%c0_36, %c0_37, %c0_38, %c0_39], %107 {strides = array<i32>} : memref<1x2x8x128xf32, #tpu.memory_space<vmem>>, vector<1x2x8x128xf32>,
    return
  }
  func.func @transform_0(%arg0: i32) -> (i32, i32, i32, i32) {
    %c0_i32 = arith.constant 0 : i32
    %c0_i32_0 = arith.constant 0 : i32
    %c0_i32_1 = arith.constant 0 : i32
    %c0_i32_2 = arith.constant 0 : i32
    return %arg0, %c0_i32, %c0_i32_0, %c0_i32_1 : i32, i32, i32, i32
  }
  func.func @transform_1(%arg0: i32) -> (i32, i32, i32) {
    %c0_i32 = arith.constant 0 : i32
    %c0_i32_0 = arith.constant 0 : i32
    %c0_i32_1 = arith.constant 0 : i32
    return %arg0, %c0_i32, %c0_i32_0 : i32, i32, i32
  }
  func.func @transform_2(%arg0: i32) -> (i32, i32, i32) {
    %c0_i32 = arith.constant 0 : i32
    %c0_i32_0 = arith.constant 0 : i32
    %c0_i32_1 = arith.constant 0 : i32
    return %arg0, %c0_i32, %c0_i32_0 : i32, i32, i32
  }
  func.func @transform_3(%arg0: i32) -> (i32, i32, i32) {
    %c0_i32 = arith.constant 0 : i32
    %c0_i32_0 = arith.constant 0 : i32
    %c0_i32_1 = arith.constant 0 : i32
    return %arg0, %c0_i32, %c0_i32_0 : i32, i32, i32
  }
  func.func @transform_4(%arg0: i32) -> (i32, i32, i32) {
    %c0_i32 = arith.constant 0 : i32
    %c0_i32_0 = arith.constant 0 : i32
    %c0_i32_1 = arith.constant 0 : i32
    return %arg0, %c0_i32, %c0_i32_0 : i32, i32, i32
  }
  func.func @transform_5(%arg0: i32) -> (i32, i32, i32, i32) {
    %c0_i32 = arith.constant 0 : i32
    %c0_i32_0 = arith.constant 0 : i32
    %c0_i32_1 = arith.constant 0 : i32
    %c0_i32_2 = arith.constant 0 : i32
    return %arg0, %c0_i32, %c0_i32_0, %c0_i32_1 : i32, i32, i32, i32
  }
}

</mosaic_0001>

<llo_original>
// kernel: tpu_custom_call.1
$region0: #{tpu_custom_call.1}
  #allocation0 [shape = 'u32[]', space=smem, size = 0x4, offset = 0x4, fixed_abs, tag = 'smem constant byte address 0x4 - core index']
  #allocation1 [shape = 'u32[72,128]{1,0:T(1,128)}', space=vmem, size = 0x9000, scoped, tag = 'internal scratch']
  %s0 = inlined_call_operand.hbm [shape: f32[2,2,8,128], index: 0, kind: input, shape index: {}]
  %s1 = inlined_call_operand.hbm [shape: bf16[2,128,384], index: 1, kind: input, shape index: {}]
  %s2 = inlined_call_operand.hbm [shape: f32[2,1,384], index: 2, kind: input, shape index: {}]
  %s3 = inlined_call_operand.hbm [shape: bf16[2,128,128], index: 3, kind: input, shape index: {}]
  %s4 = inlined_call_operand.vmem [shape: f32[2,1,128], index: 4, kind: input, shape index: {}]
  %s5 = inlined_call_operand.hbm [shape: f32[2,2,8,128], index: 5, kind: output, shape index: {}]
  %s6 = sld [smem:[#allocation0]]
  $region69: #{tpu_custom_call.1} parent=0
    _
  %s8 = ssub.s32 1, %s6
  %s9 = scalar_select 0, %s8, %s6
  $region1: #{tpu_custom_call.1} parent=0
    #allocation2 [shape = 'u8[16384]{0}', space=vmem, size = 0x4000, scoped, tag = 'input window, operand 0']
    #allocation3 [shape = 's32[2]{0}', space=sflag, size = 0x8, scoped, tag = 'scoped memory for tpu_custom_call.1']
    #allocation4 [shape = 's32[2]{0}', space=sflag, size = 0x8, scoped, tag = 'scoped memory for tpu_custom_call.1']
    #allocation5 [shape = 'u8[196608]{0}', space=vmem, size = 0x30000, scoped, tag = 'input window, operand 1']
    #allocation6 [shape = 's32[2]{0}', space=sflag, size = 0x8, scoped, tag = 'scoped memory for tpu_custom_call.1']
    #allocation7 [shape = 'u8[3072]{0}', space=vmem, size = 0xc00, scoped, tag = 'input window, operand 2']
    #allocation8 [shape = 'u8[65536]{0}', space=vmem, size = 0x10000, scoped, tag = 'input window, operand 3']
    #allocation9 [shape = 's32[2]{0}', space=sflag, size = 0x8, scoped, tag = 'scoped memory for tpu_custom_call.1']
    #allocation10 [shape = 'u8[16384]{0}', space=vmem, size = 0x4000, scoped, tag = 'output window, operand 0']
    %10 = vsyncpa [#allocation3], 0
    %s11 = scalar_lea.sflag [#allocation3], 1
    %12 = vsyncpa %s11, 0
    %13 = vsyncpa [#allocation6], 0
    %s14 = scalar_lea.sflag [#allocation6], 1
    %15 = vsyncpa %s14, 0
    %16 = vsyncpa [#allocation9], 0
    %s17 = scalar_lea.sflag [#allocation9], 1
    %18 = vsyncpa %s17, 0
    %19 = vsyncpa [#allocation4], 0
    %s20 = scalar_lea.sflag [#allocation4], 1
    %21 = vsyncpa %s20, 0
    loop: start=0, step=1, limit=4
    $region2: #{tpu_custom_call.1} parent=1 // loop_pre_header
      _
    $region3: #{tpu_custom_call.1} parent=1 // loop_header
      %s23 = sphi 0, %s27
      %p24 = scmp.ge.s32.totalorder %s23, 4
      %s33 = sphi 0, %s35
      %s36 = sphi 0, %s33
      %s37 = sphi 0, %s36
      %s53 = sphi 0, %s37
      %s59 = sphi 0, %s61
      %s62 = sphi 0, %s59
      %s63 = sphi 0, %s62
      %s79 = sphi 0, %s63
      %s85 = sphi 0, %s87
      %s88 = sphi 0, %s85
      %s89 = sphi 0, %s88
      %s105 = sphi 0, %s89
      %s111 = sphi 0, %s113
      %s114 = sphi 0, %s111
      %s115 = sphi 0, %s114
      %s131 = sphi 0, %s115
      %s137 = sphi 0, %s139
      %s140 = sphi 0, %s137
      %s141 = sphi 0, %s140
      %s157 = sphi 0, %s141
      %s163 = sphi 0, %s165
      %s166 = sphi 0, %s163
      %s167 = sphi 0, %s166
      %s183 = sphi 0, %s167
    $region4: #{tpu_custom_call.1} parent=1 // loop_header_branch
      %26 = sbr.rel (%p24) target = $region8
    $region5: #{tpu_custom_call.1} parent=1 // loop_body
      %s28 = ssub.s32 %s23, 1
      %s29 = ssub.s32 %s23, 2
      %s30 = sadd.s32 %s23, 1
      %s31 = ssub.s32 %s23, %s30
      %p32 = scmp.eq.s32.totalorder %s31, 0
      %s34 = sadd.s32 %s33, 1
      %s35 = scalar_select %p32, %s33, %s34
      %p38 = pneg %p32
      %p39 = scmp.eq.s32.totalorder %s23, 1
      %p40 = por %p38, %p39
      %p41 = scmp.ne.s32.totalorder %s33, %s36
      %p42 = scmp.eq.s32.totalorder %s23, 0
      %p43 = por %p41, %p42
      %p44 = scmp.ne.s32.totalorder %s33, %s36
      %p45 = scmp.eq.s32.totalorder %s28, 1
      %p46 = por %p44, %p45
      %p47 = scmp.ne.s32.totalorder %s36, %s37
      %p48 = scmp.eq.s32.totalorder %s28, 0
      %p49 = por %p47, %p48
      %p50 = scmp.ne.s32.totalorder %s36, %s37
      %p51 = scmp.eq.s32.totalorder %s29, 1
      %p52 = por %p50, %p51
      %p54 = scmp.ne.s32.totalorder %s37, %s53
      %p55 = scmp.eq.s32.totalorder %s29, 0
      %p56 = por %p54, %p55
      %s57 = ssub.s32 %s23, %s30
      %p58 = scmp.eq.s32.totalorder %s57, 0
      %s60 = sadd.s32 %s59, 1
      %s61 = scalar_select %p58, %s59, %s60
      %p64 = pneg %p58
      %p65 = scmp.eq.s32.totalorder %s23, 1
      %p66 = por %p64, %p65
      %p67 = scmp.ne.s32.totalorder %s59, %s62
      %p68 = scmp.eq.s32.totalorder %s23, 0
      %p69 = por %p67, %p68
      %p70 = scmp.ne.s32.totalorder %s59, %s62
      %p71 = scmp.eq.s32.totalorder %s28, 1
      %p72 = por %p70, %p71
      %p73 = scmp.ne.s32.totalorder %s62, %s63
      %p74 = scmp.eq.s32.totalorder %s28, 0
      %p75 = por %p73, %p74
      %p76 = scmp.ne.s32.totalorder %s62, %s63
      %p77 = scmp.eq.s32.totalorder %s29, 1
      %p78 = por %p76, %p77
      %p80 = scmp.ne.s32.totalorder %s63, %s79
      %p81 = scmp.eq.s32.totalorder %s29, 0
      %p82 = por %p80, %p81
      %s83 = ssub.s32 %s23, %s30
      %p84 = scmp.eq.s32.totalorder %s83, 0
      %s86 = sadd.s32 %s85, 1
      %s87 = scalar_select %p84, %s85, %s86
      %p90 = pneg %p84
      %p91 = scmp.eq.s32.totalorder %s23, 1
      %p92 = por %p90, %p91
      %p93 = scmp.ne.s32.totalorder %s85, %s88
      %p94 = scmp.eq.s32.totalorder %s23, 0
      %p95 = por %p93, %p94
      %p96 = scmp.ne.s32.totalorder %s85, %s88
      %p97 = scmp.eq.s32.totalorder %s28, 1
      %p98 = por %p96, %p97
      %p99 = scmp.ne.s32.totalorder %s88, %s89
      %p100 = scmp.eq.s32.totalorder %s28, 0
      %p101 = por %p99, %p100
      %p102 = scmp.ne.s32.totalorder %s88, %s89
      %p103 = scmp.eq.s32.totalorder %s29, 1
      %p104 = por %p102, %p103
      %p106 = scmp.ne.s32.totalorder %s89, %s105
      %p107 = scmp.eq.s32.totalorder %s29, 0
      %p108 = por %p106, %p107
      %s109 = ssub.s32 %s23, %s30
      %p110 = scmp.eq.s32.totalorder %s109, 0
      %s112 = sadd.s32 %s111, 1
      %s113 = scalar_select %p110, %s111, %s112
      %p116 = pneg %p110
      %p117 = scmp.eq.s32.totalorder %s23, 1
      %p118 = por %p116, %p117
      %p119 = scmp.ne.s32.totalorder %s111, %s114
      %p120 = scmp.eq.s32.totalorder %s23, 0
      %p121 = por %p119, %p120
      %p122 = scmp.ne.s32.totalorder %s111, %s114
      %p123 = scmp.eq.s32.totalorder %s28, 1
      %p124 = por %p122, %p123
      %p125 = scmp.ne.s32.totalorder %s114, %s115
      %p126 = scmp.eq.s32.totalorder %s28, 0
      %p127 = por %p125, %p126
      %p128 = scmp.ne.s32.totalorder %s114, %s115
      %p129 = scmp.eq.s32.totalorder %s29, 1
      %p130 = por %p128, %p129
      %p132 = scmp.ne.s32.totalorder %s115, %s131
      %p133 = scmp.eq.s32.totalorder %s29, 0
      %p134 = por %p132, %p133
      %s135 = ssub.s32 %s23, %s30
      %p136 = scmp.eq.s32.totalorder %s135, 0
      %s138 = sadd.s32 %s137, 1
      %s139 = scalar_select %p136, %s137, %s138
      %p142 = pneg %p136
      %p143 = scmp.eq.s32.totalorder %s23, 1
      %p144 = por %p142, %p143
      %p145 = scmp.ne.s32.totalorder %s137, %s140
      %p146 = scmp.eq.s32.totalorder %s23, 0
      %p147 = por %p145, %p146
      %p148 = scmp.ne.s32.totalorder %s137, %s140
      %p149 = scmp.eq.s32.totalorder %s28, 1
      %p150 = por %p148, %p149
      %p151 = scmp.ne.s32.totalorder %s140, %s141
      %p152 = scmp.eq.s32.totalorder %s28, 0
      %p153 = por %p151, %p152
      %p154 = scmp.ne.s32.totalorder %s140, %s141
      %p155 = scmp.eq.s32.totalorder %s29, 1
      %p156 = por %p154, %p155
      %p158 = scmp.ne.s32.totalorder %s141, %s157
      %p159 = scmp.eq.s32.totalorder %s29, 0
      %p160 = por %p158, %p159
      %s161 = ssub.s32 %s23, %s30
      %p162 = scmp.eq.s32.totalorder %s161, 0
      %s164 = sadd.s32 %s163, 1
      %s165 = scalar_select %p162, %s163, %s164
      %p168 = pneg %p162
      %p169 = scmp.eq.s32.totalorder %s23, 1
      %p170 = por %p168, %p169
      %p171 = scmp.ne.s32.totalorder %s163, %s166
      %p172 = scmp.eq.s32.totalorder %s23, 0
      %p173 = por %p171, %p172
      %p174 = scmp.ne.s32.totalorder %s163, %s166
      %p175 = scmp.eq.s32.totalorder %s28, 1
      %p176 = por %p174, %p175
      %p177 = scmp.ne.s32.totalorder %s166, %s167
      %p178 = scmp.eq.s32.totalorder %s28, 0
      %p179 = por %p177, %p178
      %p180 = scmp.ne.s32.totalorder %s166, %s167
      %p181 = scmp.eq.s32.totalorder %s29, 1
      %p182 = por %p180, %p181
      %p184 = scmp.ne.s32.totalorder %s167, %s183
      %p185 = scmp.eq.s32.totalorder %s29, 0
      %p186 = por %p184, %p185
      %p187 = scmp.le.s32.totalorder 1, %s23
      %p188 = scmp.lt.s32.totalorder %s23, 3
      %p189 = pnand %p187, %p188
      %p190 = pneg %p189
      // Predicated region
      $region9: #{tpu_custom_call.1} parent=5 // pred_check
        _
      $region10: #{tpu_custom_call.1} parent=5 // pred_check_branch
        %192 = sbr.rel (%p189) target = $region12
      $region11: #{tpu_custom_call.1} parent=5 // pred_region
        %s193 = ssub.s32 %s23, 1
      $region12: #{tpu_custom_call.1} parent=5 // pred_fallthru
        _
      %p194 = scmp.lt.s32.totalorder %s23, 2
      // Predicated region
      $region13: #{tpu_custom_call.1} parent=5 // pred_check
        %p195 = pneg %p194
      $region14: #{tpu_custom_call.1} parent=5 // pred_check_branch
        %197 = sbr.rel (%p195) target = $region16
      $region15: #{tpu_custom_call.1} parent=5 // pred_region
        // Predicated region
        $region17: #{tpu_custom_call.1} parent=15 // pred_check
          %p198 = pneg %p43
        $region18: #{tpu_custom_call.1} parent=15 // pred_check_branch
          %200 = sbr.rel (%p198) target = $region20
        $region19: #{tpu_custom_call.1} parent=15 // pred_region
          %s201 = sand.u32 %s33, 1
          %s202 = scalar_lea.sflag [#allocation3], %s201
          %s203 = sand.u32 %s33, 1
          %s204 = smul.addr %s203, 16
          %s205 = scalar_lea.vmem [#allocation2], %s204
          %207 = vsyncadd %s202, 0
          %s208 = smul.addr %s23, 2
          %s209 = smul.addr %s208, 8
          %s210 = scalar_lea.hbm %s0, %s209
          %s211 = sshll.u32 %s210, 4
          %s212 = int_to_ptr.hbm [resolvable:$true] %s211
          %s213 = sshll.u32 %s205, 4
          %s214 = int_to_ptr.vmem [resolvable:$true] %s213
          %219 = dma.hbm_to_vmem [thread:$0]  %s212, 256, %s214, %s202, 128, 128, 8
        $region20: #{tpu_custom_call.1} parent=15 // pred_fallthru
          _
        // Predicated region
        $region21: #{tpu_custom_call.1} parent=15 // pred_check
          %p220 = pneg %p69
        $region22: #{tpu_custom_call.1} parent=15 // pred_check_branch
          %222 = sbr.rel (%p220) target = $region24
        $region23: #{tpu_custom_call.1} parent=15 // pred_region
          %s223 = sand.u32 %s23, 1
          %s224 = scalar_lea.sflag [#allocation6], %s223
          %s225 = sand.u32 %s59, 1
          %s226 = smul.addr %s225, 192
          %s227 = scalar_lea.vmem [#allocation5], %s226
          %229 = vsyncadd %s224, 0
          %s230 = smul.addr %s23, 48
          %s231 = smul.addr %s230, 4
          %s232 = scalar_lea.hbm %s1, %s231
          %s233 = sshll.u32 %s232, 4
          %s234 = int_to_ptr.hbm [resolvable:$true] %s233
          %s235 = sshll.u32 %s227, 4
          %s236 = int_to_ptr.vmem [resolvable:$true] %s235
          %241 = dma.hbm_to_vmem [thread:$0]  %s234, 3072, %s236, %s224, 192, 192, 12
        $region24: #{tpu_custom_call.1} parent=15 // pred_fallthru
          _
        // Predicated region
        $region25: #{tpu_custom_call.1} parent=15 // pred_check
          %p242 = pneg %p95
        $region26: #{tpu_custom_call.1} parent=15 // pred_check_branch
          %244 = sbr.rel (%p242) target = $region28
        $region27: #{tpu_custom_call.1} parent=15 // pred_region
          %s245 = sand.u32 %s23, 1
          %s246 = scalar_lea.sflag [#allocation6], %s245
          %s247 = sand.u32 %s85, 1
          %s248 = smul.addr %s247, 3
          %s249 = scalar_lea.vmem [#allocation7], %s248
          %251 = vsyncadd %s246, 0
          %s252 = smul.addr %s23, 3
          %s253 = scalar_lea.hbm %s2, %s252
          %s255 = sshll.u32 %s253, 4
          %s256 = int_to_ptr.hbm [resolvable:$true] %s255
          %s257 = sshll.u32 %s249, 4
          %s258 = int_to_ptr.vmem [resolvable:$true] %s257
          %260 = dma.hbm_to_vmem [thread:$0]  %s256, 48, %s258, %s246
        $region28: #{tpu_custom_call.1} parent=15 // pred_fallthru
          _
        // Predicated region
        $region29: #{tpu_custom_call.1} parent=15 // pred_check
          %p261 = pneg %p121
        $region30: #{tpu_custom_call.1} parent=15 // pred_check_branch
          %263 = sbr.rel (%p261) target = $region32
        $region31: #{tpu_custom_call.1} parent=15 // pred_region
          %s264 = sand.u32 %s111, 1
          %s265 = scalar_lea.sflag [#allocation9], %s264
          %s266 = sand.u32 %s111, 1
          %s267 = smul.addr %s266, 64
          %s268 = scalar_lea.vmem [#allocation8], %s267
          %270 = vsyncadd %s265, 0
          %s271 = smul.addr %s23, 16
          %s272 = smul.addr %s271, 4
          %s273 = scalar_lea.hbm %s3, %s272
          %s274 = sshll.u32 %s273, 4
          %s275 = int_to_ptr.hbm [resolvable:$true] %s274
          %s276 = sshll.u32 %s268, 4
          %s277 = int_to_ptr.vmem [resolvable:$true] %s276
          %282 = dma.hbm_to_vmem [thread:$0]  %s275, 1024, %s277, %s265, 64, 64, 4
        $region32: #{tpu_custom_call.1} parent=15 // pred_fallthru
          _
        // Predicated region
        $region33: #{tpu_custom_call.1} parent=15 // pred_check
          %p283 = pneg %p147
        $region34: #{tpu_custom_call.1} parent=15 // pred_check_branch
          %285 = sbr.rel (%p283) target = $region36
        $region35: #{tpu_custom_call.1} parent=15 // pred_region
          %p286 = scmp.lt.s32.totalorder %s23, 1
          %s287 = scalar_select %p286, %s23, 1
          %s288 = scalar_lea.vmem %s4, %s287
        $region36: #{tpu_custom_call.1} parent=15 // pred_fallthru
          _
      $region16: #{tpu_custom_call.1} parent=5 // pred_fallthru
        _
      %p289 = scmp.le.s32.totalorder 1, %s23
      %p290 = scmp.lt.s32.totalorder %s23, 3
      %p291 = pnand %p289, %p290
      %p292 = pneg %p291
      // Predicated region
      $region37: #{tpu_custom_call.1} parent=5 // pred_check
        _
      $region38: #{tpu_custom_call.1} parent=5 // pred_check_branch
        %294 = sbr.rel (%p291) target = $region40
      $region39: #{tpu_custom_call.1} parent=5 // pred_region
        %s295 = ssub.s32 %s23, 1
        %s296 = sand.u32 %s36, 1
        %s297 = scalar_lea.sflag [#allocation3], %s296
        %s298 = sand.u32 %s36, 1
        %s299 = smul.addr %s298, 16
        %s300 = scalar_lea.vmem [#allocation2], %s299
        // Predicated region
        $region41: #{tpu_custom_call.1} parent=39 // pred_check
          %p301 = pneg %p49
        $region42: #{tpu_custom_call.1} parent=39 // pred_check_branch
          %303 = sbr.rel (%p301) target = $region44
        $region43: #{tpu_custom_call.1} parent=39 // pred_region
          %305 = dma.done %s297, 256
        $region44: #{tpu_custom_call.1} parent=39 // pred_fallthru
          _
        %s306 = sand.u32 %s28, 1
        %s307 = scalar_lea.sflag [#allocation6], %s306
        %s308 = sand.u32 %s62, 1
        %s309 = smul.addr %s308, 192
        %s310 = scalar_lea.vmem [#allocation5], %s309
        // Predicated region
        $region45: #{tpu_custom_call.1} parent=39 // pred_check
          %p311 = pneg %p75
        $region46: #{tpu_custom_call.1} parent=39 // pred_check_branch
          %313 = sbr.rel (%p311) target = $region48
        $region47: #{tpu_custom_call.1} parent=39 // pred_region
          %315 = dma.done %s307, 3072
        $region48: #{tpu_custom_call.1} parent=39 // pred_fallthru
          _
        %s316 = sand.u32 %s28, 1
        %s317 = scalar_lea.sflag [#allocation6], %s316
        %s318 = sand.u32 %s88, 1
        %s319 = smul.addr %s318, 3
        %s320 = scalar_lea.vmem [#allocation7], %s319
        // Predicated region
        $region49: #{tpu_custom_call.1} parent=39 // pred_check
          %p321 = pneg %p101
        $region50: #{tpu_custom_call.1} parent=39 // pred_check_branch
          %323 = sbr.rel (%p321) target = $region52
        $region51: #{tpu_custom_call.1} parent=39 // pred_region
          %325 = dma.done %s317, 48
        $region52: #{tpu_custom_call.1} parent=39 // pred_fallthru
          _
        %s326 = sand.u32 %s114, 1
        %s327 = scalar_lea.sflag [#allocation9], %s326
        %s328 = sand.u32 %s114, 1
        %s329 = smul.addr %s328, 64
        %s330 = scalar_lea.vmem [#allocation8], %s329
        // Predicated region
        $region53: #{tpu_custom_call.1} parent=39 // pred_check
          %p331 = pneg %p127
        $region54: #{tpu_custom_call.1} parent=39 // pred_check_branch
          %333 = sbr.rel (%p331) target = $region56
        $region55: #{tpu_custom_call.1} parent=39 // pred_region
          %335 = dma.done %s327, 1024
        $region56: #{tpu_custom_call.1} parent=39 // pred_fallthru
          _
        %s336 = sand.u32 %s36, 1
        %s337 = scalar_lea.sflag [#allocation3], %s336
        %s338 = sand.u32 %s36, 1
        %s339 = smul.addr %s338, 16
        %s340 = scalar_lea.vmem [#allocation2], %s339
        %p341 = pneg %p49
        %p342 = pneg %p46
        %s343 = sand.u32 %s28, 1
        %s344 = scalar_lea.sflag [#allocation6], %s343
        %s345 = sand.u32 %s62, 1
        %s346 = smul.addr %s345, 192
        %s347 = scalar_lea.vmem [#allocation5], %s346
        %p348 = pneg %p75
        %p349 = pneg %p72
        %s350 = sand.u32 %s28, 1
        %s351 = scalar_lea.sflag [#allocation6], %s350
        %s352 = sand.u32 %s88, 1
        %s353 = smul.addr %s352, 3
        %s354 = scalar_lea.vmem [#allocation7], %s353
        %p355 = pneg %p101
        %p356 = pneg %p98
        %s357 = sand.u32 %s114, 1
        %s358 = scalar_lea.sflag [#allocation9], %s357
        %s359 = sand.u32 %s114, 1
        %s360 = smul.addr %s359, 64
        %s361 = scalar_lea.vmem [#allocation8], %s360
        %p362 = pneg %p127
        %p363 = pneg %p124
        %p364 = scmp.lt.s32.totalorder %s28, 1
        %s365 = scalar_select %p364, %s28, 1
        %s366 = scalar_lea.vmem %s4, %s365
        %p367 = pneg %p153
        %p368 = pneg %p150
        %p369 = pneg %p179
        %p370 = pneg %p176
        %s371 = sand.u32 %s166, 1
        %s372 = scalar_lea.sflag [#allocation4], %s371
        %s373 = sand.u32 %s166, 1
        %s374 = smul.addr %s373, 16
        %s375 = scalar_lea.vmem [#allocation10], %s374
        %p376 = scmp.lt.s32.totalorder %s28, 1
        %s377 = scalar_select %p376, %s28, 1
        %s378 = scalar_lea.vmem %s4, %s377
        %v380 = vld [vmem:[%s300] sm:$0xff]
        %v381 = vld [vmem:[%s300 + $0x8] sm:$0xff]
        %v382 = vld [vmem:[%s310] sm:$0xff]
        %v383 = vld [vmem:[%s310 + $0x8] sm:$0xf]
        %v384 = vld [vmem:[%s310 + $0xc] sm:$0xff]
        %v385 = vld [vmem:[%s310 + $0x14] sm:$0xf]
        %v386 = vld [vmem:[%s310 + $0x18] sm:$0xff]
        %v387 = vld [vmem:[%s310 + $0x20] sm:$0xf]
        %v388 = vld [vmem:[%s310 + $0x24] sm:$0xff]
        %v389 = vld [vmem:[%s310 + $0x2c] sm:$0xf]
        %v390 = vld [vmem:[%s310 + $0x30] sm:$0xff]
        %v391 = vld [vmem:[%s310 + $0x38] sm:$0xf]
        %v392 = vld [vmem:[%s310 + $0x3c] sm:$0xff]
        %v393 = vld [vmem:[%s310 + $0x44] sm:$0xf]
        %v394 = vld [vmem:[%s310 + $0x48] sm:$0xff]
        %v395 = vld [vmem:[%s310 + $0x50] sm:$0xf]
        %v396 = vld [vmem:[%s310 + $0x54] sm:$0xff]
        %v397 = vld [vmem:[%s310 + $0x5c] sm:$0xf]
        %v398 = vld [vmem:[%s310 + $0x60] sm:$0xff]
        %v399 = vld [vmem:[%s310 + $0x68] sm:$0xf]
        %v400 = vld [vmem:[%s310 + $0x6c] sm:$0xff]
        %v401 = vld [vmem:[%s310 + $0x74] sm:$0xf]
        %v402 = vld [vmem:[%s310 + $0x78] sm:$0xff]
        %v403 = vld [vmem:[%s310 + $0x80] sm:$0xf]
        %v404 = vld [vmem:[%s310 + $0x84] sm:$0xff]
        %v405 = vld [vmem:[%s310 + $0x8c] sm:$0xf]
        %v406 = vld [vmem:[%s310 + $0x90] sm:$0xff]
        %v407 = vld [vmem:[%s310 + $0x98] sm:$0xf]
        %v408 = vld [vmem:[%s310 + $0x9c] sm:$0xff]
        %v409 = vld [vmem:[%s310 + $0xa4] sm:$0xf]
        %v410 = vld [vmem:[%s310 + $0xa8] sm:$0xff]
        %v411 = vld [vmem:[%s310 + $0xb0] sm:$0xf]
        %v412 = vld [vmem:[%s310 + $0xb4] sm:$0xff]
        %v413 = vld [vmem:[%s310 + $0xbc] sm:$0xf]
        %v414 = vld [vmem:[%s320] sm:$0x7]
        %v415 = vld [vmem:[%s330] sm:$0xf]
        %v416 = vld [vmem:[%s330 + $0x4] sm:$0xf]
        %v417 = vld [vmem:[%s330 + $0x8] sm:$0xf]
        %v418 = vld [vmem:[%s330 + $0xc] sm:$0xf]
        %v419 = vld [vmem:[%s330 + $0x10] sm:$0xf]
        %v420 = vld [vmem:[%s330 + $0x14] sm:$0xf]
        %v421 = vld [vmem:[%s330 + $0x18] sm:$0xf]
        %v422 = vld [vmem:[%s330 + $0x1c] sm:$0xf]
        %v423 = vld [vmem:[%s330 + $0x20] sm:$0xf]
        %v424 = vld [vmem:[%s330 + $0x24] sm:$0xf]
        %v425 = vld [vmem:[%s330 + $0x28] sm:$0xf]
        %v426 = vld [vmem:[%s330 + $0x2c] sm:$0xf]
        %v427 = vld [vmem:[%s330 + $0x30] sm:$0xf]
        %v428 = vld [vmem:[%s330 + $0x34] sm:$0xf]
        %v429 = vld [vmem:[%s330 + $0x38] sm:$0xf]
        %v430 = vld [vmem:[%s330 + $0x3c] sm:$0xf]
        %v431 = vld [vmem:[%s378] sm:$0x1]
        %v432 = vpack.c.bf16 %v381, %v380
        %v434 = vperm.slane %v414, 0
        %v435 = vperm.slane %v414, 1
        %v436 = vperm.slane %v414, 2
        %v472 = vunpack.c.l.b16 %v382
        %v473 = vunpack.c.h.b16 %v382
        %v474 = vunpack.c.l.b16 %v383
        %v475 = vunpack.c.l.b16 %v384
        %v476 = vunpack.c.h.b16 %v384
        %v477 = vunpack.c.l.b16 %v385
        %v478 = vunpack.c.l.b16 %v386
        %v479 = vunpack.c.h.b16 %v386
        %v480 = vunpack.c.l.b16 %v387
        %v481 = vunpack.c.l.b16 %v388
        %v482 = vunpack.c.h.b16 %v388
        %v483 = vunpack.c.l.b16 %v389
        %v484 = vunpack.c.l.b16 %v390
        %v485 = vunpack.c.h.b16 %v390
        %v486 = vunpack.c.l.b16 %v391
        %v487 = vunpack.c.l.b16 %v392
        %v488 = vunpack.c.h.b16 %v392
        %v489 = vunpack.c.l.b16 %v393
        %v490 = vunpack.c.l.b16 %v394
        %v491 = vunpack.c.h.b16 %v394
        %v492 = vunpack.c.l.b16 %v395
        %v493 = vunpack.c.l.b16 %v396
        %v494 = vunpack.c.h.b16 %v396
        %v495 = vunpack.c.l.b16 %v397
        %v496 = vunpack.c.l.b16 %v398
        %v497 = vunpack.c.h.b16 %v398
        %v498 = vunpack.c.l.b16 %v399
        %v499 = vunpack.c.l.b16 %v400
        %v500 = vunpack.c.h.b16 %v400
        %v501 = vunpack.c.l.b16 %v401
        %v502 = vunpack.c.l.b16 %v402
        %v503 = vunpack.c.h.b16 %v402
        %v504 = vunpack.c.l.b16 %v403
        %v505 = vunpack.c.l.b16 %v404
        %v506 = vunpack.c.h.b16 %v404
        %v507 = vunpack.c.l.b16 %v405
        %v508 = vunpack.c.l.b16 %v406
        %v509 = vunpack.c.h.b16 %v406
        %v510 = vunpack.c.l.b16 %v407
        %v511 = vunpack.c.l.b16 %v408
        %v512 = vunpack.c.h.b16 %v408
        %v513 = vunpack.c.l.b16 %v409
        %v514 = vunpack.c.l.b16 %v410
        %v515 = vunpack.c.h.b16 %v410
        %v516 = vunpack.c.l.b16 %v411
        %v517 = vunpack.c.l.b16 %v412
        %v518 = vunpack.c.h.b16 %v412
        %v519 = vunpack.c.l.b16 %v413
        %v520 = vpack.c.b16 %v475, %v472
        %v521 = vpack.c.b16 %v476, %v473
        %v522 = vpack.c.b16 %v477, %v474
        %v523 = vpack.c.b16 %v481, %v478
        %v524 = vpack.c.b16 %v482, %v479
        %v525 = vpack.c.b16 %v483, %v480
        %v526 = vpack.c.b16 %v487, %v484
        %v527 = vpack.c.b16 %v488, %v485
        %v528 = vpack.c.b16 %v489, %v486
        %v529 = vpack.c.b16 %v493, %v490
        %v530 = vpack.c.b16 %v494, %v491
        %v531 = vpack.c.b16 %v495, %v492
        %v532 = vpack.c.b16 %v499, %v496
        %v533 = vpack.c.b16 %v500, %v497
        %v534 = vpack.c.b16 %v501, %v498
        %v535 = vpack.c.b16 %v505, %v502
        %v536 = vpack.c.b16 %v506, %v503
        %v537 = vpack.c.b16 %v507, %v504
        %v538 = vpack.c.b16 %v511, %v508
        %v539 = vpack.c.b16 %v512, %v509
        %v540 = vpack.c.b16 %v513, %v510
        %v541 = vpack.c.b16 %v517, %v514
        %v542 = vpack.c.b16 %v518, %v515
        %v543 = vpack.c.b16 %v519, %v516
        %568 = vmatpush.bf16.msra.mxu0 %v541
        %569 = vmatpush.bf16.msra.mxu0 %v538
        %570 = vmatpush.bf16.msra.mxu0 %v535
        %571 = vmatpush.bf16.msra.mxu0 %v532
        %572 = vmatpush.bf16.msra.mxu0 %v529
        %573 = vmatpush.bf16.msra.mxu0 %v526
        %574 = vmatpush.bf16.msra.mxu0 %v523
        %575 = vmatpush.bf16.msra.mxu0 %v520
        %576 = vmatmul.bf16.gmra.mxu0 %v432
        %v577 = vpop.f32.mrf.mxu0
        %v578 = vadd.f32 %v434, %v577
        %v579 = vpop.f32.mrf.mxu0
        %v580 = vadd.f32 %v434, %v579
        %581 = vdwg.mxu0
        %582 = vmatpush.bf16.msra.mxu0 %v542
        %583 = vmatpush.bf16.msra.mxu0 %v539
        %584 = vmatpush.bf16.msra.mxu0 %v536
        %585 = vmatpush.bf16.msra.mxu0 %v533
        %586 = vmatpush.bf16.msra.mxu0 %v530
        %587 = vmatpush.bf16.msra.mxu0 %v527
        %588 = vmatpush.bf16.msra.mxu0 %v524
        %589 = vmatpush.bf16.msra.mxu0 %v521
        %590 = vmatmul.bf16.gmra.mxu0 %v432
        %v591 = vpop.f32.mrf.mxu0
        %v592 = vadd.f32 %v435, %v591
        %v593 = vpop.f32.mrf.mxu0
        %v594 = vadd.f32 %v435, %v593
        %595 = vdwg.mxu0
        %596 = vmatpush.bf16.msra.mxu0 %v543
        %597 = vmatpush.bf16.msra.mxu0 %v540
        %598 = vmatpush.bf16.msra.mxu0 %v537
        %599 = vmatpush.bf16.msra.mxu0 %v534
        %600 = vmatpush.bf16.msra.mxu0 %v531
        %601 = vmatpush.bf16.msra.mxu0 %v528
        %602 = vmatpush.bf16.msra.mxu0 %v525
        %603 = vmatpush.bf16.msra.mxu0 %v522
        %604 = vmatmul.bf16.gmra.mxu0 %v432
        %v605 = vpop.f32.mrf.mxu0
        %v606 = vadd.f32 %v436, %v605
        %v607 = vpop.f32.mrf.mxu0
        %v608 = vadd.f32 %v436, %v607
        %609 = vdwg.mxu0
        %v610 = vpack.c.bf16 %v592, %v578
        %v611 = vpack.c.bf16 %v606, %v606
        %v612 = vpack.c.bf16 %v594, %v580
        %v613 = vpack.c.bf16 %v608, %v608
        %v615 = vrot.slane %v610, 4
        %vm616 = vcmask 261120
        %v618 = vsel %vm616, %v610, 0
        %v621 = vsel %vm616, %v615, 0
        %623 = vmatpush.bf16.xpose.msra.mxu0 0
        %624 = vmatpush.bf16.xpose.msra.mxu0 0
        %625 = vmatpush.bf16.xpose.msra.mxu0 0
        %626 = vmatpush.bf16.xpose.msra.mxu0 0
        %627 = vmatpush.bf16.xpose.msra.mxu0 0
        %628 = vmatpush.bf16.xpose.msra.mxu0 0
        %629 = vmatpush.bf16.xpose.msra.mxu0 0
        %630 = vmatpush.bf16.xpose.msra.mxu0 %v621
        %631 = vmatmul.bf16.gmra.mxu0 %v618
        %v632 = vpop.f32.mrf.mxu0
        %v633 = vadd.f32 0.0, %v632
        %v634 = vpop.f32.mrf.mxu0
        %635 = vdwg.mxu0
        %v637 = vrot.slane %v612, 4
        %v639 = vsel %vm616, %v612, 0
        %v642 = vsel %vm616, %v637, 0
        %644 = vmatpush.bf16.xpose.msra.mxu0 0
        %645 = vmatpush.bf16.xpose.msra.mxu0 0
        %646 = vmatpush.bf16.xpose.msra.mxu0 0
        %647 = vmatpush.bf16.xpose.msra.mxu0 0
        %648 = vmatpush.bf16.xpose.msra.mxu0 0
        %649 = vmatpush.bf16.xpose.msra.mxu0 0
        %650 = vmatpush.bf16.xpose.msra.mxu0 0
        %651 = vmatpush.bf16.xpose.msra.mxu0 %v642
        %652 = vmatmul.bf16.gmra.mxu0 %v639
        %v653 = vpop.f32.mrf.mxu0
        %v654 = vadd.f32 0.0, %v653
        %v655 = vpop.f32.mrf.mxu0
        %656 = vdwg.mxu0
        %vm657 = vcmask 64512
        %v658 = vsel %vm657, %v633, -inf
        %659 = vmax.xlane.f32.xlu0 %v658
        %v660 = vpop.xlane.xlu0 %659
        %v661 = vsel %vm657, %v654, -inf
        %662 = vmax.xlane.f32.xlu0 %v661
        %v663 = vpop.xlane.xlu0 %662
        %v664 = vsub.f32 %v633, %v660
        %v665 = vsub.f32 %v654, %v663
        %v666 = vmul.f32 %v664, 1.442695
        %v667 = vpow.pop %v666
        %v668 = vmul.f32 %v665, 1.442695
        %v669 = vpow.pop %v668
        %v670 = vsel %vm657, %v667, 0.0
        %671 = vadd.xlane.f32.xlu0 %v670
        %v672 = vpop.xlane.xlu0 %671
        %v673 = vsel %vm657, %v669, 0.0
        %674 = vadd.xlane.f32.xlu0 %v673
        %v675 = vpop.xlane.xlu0 %674
        %v676 = vpack.c.bf16 %v667, %v667
        %v677 = vpack.c.bf16 %v669, %v669
        %v679 = vsel %vm657, %v676, 0
        %vm681 = vcmask 1043456
        %v683 = vsel %vm681, %v611, 0
        %685 = vmatpush.bf16.msra.mxu0 0
        %686 = vmatpush.bf16.msra.mxu0 0
        %687 = vmatpush.bf16.msra.mxu0 0
        %688 = vmatpush.bf16.msra.mxu0 0
        %689 = vmatpush.bf16.msra.mxu0 0
        %690 = vmatpush.bf16.msra.mxu0 0
        %691 = vmatpush.bf16.msra.mxu0 0
        %692 = vmatpush.bf16.msra.mxu0 %v683
        %693 = vmatmul.bf16.gmra.mxu0 %v679
        %v694 = vpop.f32.mrf.mxu0
        %v695 = vadd.f32 0.0, %v694
        %v696 = vpop.f32.mrf.mxu0
        %697 = vdwg.mxu0
        %v699 = vsel %vm657, %v677, 0
        %v702 = vsel %vm681, %v613, 0
        %704 = vmatpush.bf16.msra.mxu0 0
        %705 = vmatpush.bf16.msra.mxu0 0
        %706 = vmatpush.bf16.msra.mxu0 0
        %707 = vmatpush.bf16.msra.mxu0 0
        %708 = vmatpush.bf16.msra.mxu0 0
        %709 = vmatpush.bf16.msra.mxu0 0
        %710 = vmatpush.bf16.msra.mxu0 0
        %711 = vmatpush.bf16.msra.mxu0 %v702
        %712 = vmatmul.bf16.gmra.mxu0 %v699
        %v713 = vpop.f32.mrf.mxu0
        %v714 = vadd.f32 0.0, %v713
        %v715 = vpop.f32.mrf.mxu0
        %716 = vdwg.mxu0
        %v717 = vrcp.pop %v672
        %v718 = vmul.f32 %v672, %v717
        %v719 = vsub.f32 1.0, %v718
        %v720 = vmul.f32 %v717, %v719
        %v721 = vadd.f32 %v717, %v720
        %vm722 = vweird.f32 %v672
        %vm723 = vweird.f32 %v717
        %vm724 = vmor %vm722, %vm723
        %v725 = vsel %vm724, %v717, %v721
        %v726 = vand.u32 2147483647, %v672
        %vm727 = vcmp.eq.f32.partialorder %v726, 8.507059e+37
        %v728 = vand.u32 %v672, 2147483648
        %v729 = vor.u32 1.1754944e-38, %v728
        %v730 = vsel %vm727, %v729, %v725
        %v731 = vrcp.pop %v675
        %v732 = vmul.f32 %v675, %v731
        %v733 = vsub.f32 1.0, %v732
        %v734 = vmul.f32 %v731, %v733
        %v735 = vadd.f32 %v731, %v734
        %vm736 = vweird.f32 %v675
        %vm737 = vweird.f32 %v731
        %vm738 = vmor %vm736, %vm737
        %v739 = vsel %vm738, %v731, %v735
        %v740 = vand.u32 2147483647, %v675
        %vm741 = vcmp.eq.f32.partialorder %v740, 8.507059e+37
        %v742 = vand.u32 %v675, 2147483648
        %v743 = vor.u32 1.1754944e-38, %v742
        %v744 = vsel %vm741, %v743, %v739
        %v745 = vmul.f32 %v695, %v730
        %v746 = vmul.f32 %v714, %v744
        %v747 = vpack.c.bf16 %v746, %v745
        %748 = vrot.lane.b32.xlu0 %v610, 96
        %v749 = vpop.permute.xlu0 %748
        %v750 = vrot.slane %v749, 4
        %v751 = vunpack.c.l.b16 %v610
        %v752 = vpack.c.b16 %v751, %v751
        %753 = vrot.lane.b32.xlu0 %v752, 96
        %v754 = vpop.permute.xlu0 %753
        %v756 = vsel %vm616, %v754, 0
        %v759 = vsel %vm616, %v750, 0
        %761 = vmatpush.bf16.xpose.msra.mxu0 0
        %762 = vmatpush.bf16.xpose.msra.mxu0 0
        %763 = vmatpush.bf16.xpose.msra.mxu0 0
        %764 = vmatpush.bf16.xpose.msra.mxu0 0
        %765 = vmatpush.bf16.xpose.msra.mxu0 0
        %766 = vmatpush.bf16.xpose.msra.mxu0 0
        %767 = vmatpush.bf16.xpose.msra.mxu0 0
        %768 = vmatpush.bf16.xpose.msra.mxu0 %v759
        %769 = vmatmul.bf16.gmra.mxu0 %v756
        %v770 = vpop.f32.mrf.mxu0
        %v771 = vadd.f32 0.0, %v770
        %v772 = vpop.f32.mrf.mxu0
        %773 = vdwg.mxu0
        %774 = vrot.lane.b32.xlu0 %v612, 96
        %v775 = vpop.permute.xlu0 %774
        %v776 = vrot.slane %v775, 4
        %v777 = vunpack.c.l.b16 %v612
        %v778 = vpack.c.b16 %v777, %v777
        %779 = vrot.lane.b32.xlu0 %v778, 96
        %v780 = vpop.permute.xlu0 %779
        %v782 = vsel %vm616, %v780, 0
        %v785 = vsel %vm616, %v776, 0
        %787 = vmatpush.bf16.xpose.msra.mxu0 0
        %788 = vmatpush.bf16.xpose.msra.mxu0 0
        %789 = vmatpush.bf16.xpose.msra.mxu0 0
        %790 = vmatpush.bf16.xpose.msra.mxu0 0
        %791 = vmatpush.bf16.xpose.msra.mxu0 0
        %792 = vmatpush.bf16.xpose.msra.mxu0 0
        %793 = vmatpush.bf16.xpose.msra.mxu0 0
        %794 = vmatpush.bf16.xpose.msra.mxu0 %v785
        %795 = vmatmul.bf16.gmra.mxu0 %v782
        %v796 = vpop.f32.mrf.mxu0
        %v797 = vadd.f32 0.0, %v796
        %v798 = vpop.f32.mrf.mxu0
        %799 = vdwg.mxu0
        %v800 = vsel %vm657, %v771, -inf
        %801 = vmax.xlane.f32.xlu0 %v800
        %v802 = vpop.xlane.xlu0 %801
        %v803 = vsel %vm657, %v797, -inf
        %804 = vmax.xlane.f32.xlu0 %v803
        %v805 = vpop.xlane.xlu0 %804
        %v806 = vsub.f32 %v771, %v802
        %v807 = vsub.f32 %v797, %v805
        %v808 = vmul.f32 %v806, 1.442695
        %v809 = vpow.pop %v808
        %v810 = vmul.f32 %v807, 1.442695
        %v811 = vpow.pop %v810
        %v812 = vsel %vm657, %v809, 0.0
        %813 = vadd.xlane.f32.xlu0 %v812
        %v814 = vpop.xlane.xlu0 %813
        %v815 = vsel %vm657, %v811, 0.0
        %816 = vadd.xlane.f32.xlu0 %v815
        %v817 = vpop.xlane.xlu0 %816
        %v818 = vpack.c.bf16 %v809, %v809
        %v819 = vpack.c.bf16 %v811, %v811
        %v821 = vunpack.c.l.b16 %v611
        %v822 = vpack.c.b16 %v821, %v821
        %823 = vrot.lane.b32.xlu0 %v822, 96
        %v824 = vpop.permute.xlu0 %823
        %v826 = vsel %vm657, %v818, 0
        %v829 = vsel %vm681, %v824, 0
        %831 = vmatpush.bf16.msra.mxu0 0
        %832 = vmatpush.bf16.msra.mxu0 0
        %833 = vmatpush.bf16.msra.mxu0 0
        %834 = vmatpush.bf16.msra.mxu0 0
        %835 = vmatpush.bf16.msra.mxu0 0
        %836 = vmatpush.bf16.msra.mxu0 0
        %837 = vmatpush.bf16.msra.mxu0 0
        %838 = vmatpush.bf16.msra.mxu0 %v829
        %839 = vmatmul.bf16.gmra.mxu0 %v826
        %v840 = vpop.f32.mrf.mxu0
        %v841 = vadd.f32 0.0, %v840
        %v842 = vpop.f32.mrf.mxu0
        %843 = vdwg.mxu0
        %v845 = vunpack.c.l.b16 %v613
        %v846 = vpack.c.b16 %v845, %v845
        %847 = vrot.lane.b32.xlu0 %v846, 96
        %v848 = vpop.permute.xlu0 %847
        %v850 = vsel %vm657, %v819, 0
        %v853 = vsel %vm681, %v848, 0
        %855 = vmatpush.bf16.msra.mxu0 0
        %856 = vmatpush.bf16.msra.mxu0 0
        %857 = vmatpush.bf16.msra.mxu0 0
        %858 = vmatpush.bf16.msra.mxu0 0
        %859 = vmatpush.bf16.msra.mxu0 0
        %860 = vmatpush.bf16.msra.mxu0 0
        %861 = vmatpush.bf16.msra.mxu0 0
        %862 = vmatpush.bf16.msra.mxu0 %v853
        %863 = vmatmul.bf16.gmra.mxu0 %v850
        %v864 = vpop.f32.mrf.mxu0
        %v865 = vadd.f32 0.0, %v864
        %v866 = vpop.f32.mrf.mxu0
        %867 = vdwg.mxu0
        %v868 = vrcp.pop %v814
        %v869 = vmul.f32 %v814, %v868
        %v870 = vsub.f32 1.0, %v869
        %v871 = vmul.f32 %v868, %v870
        %v872 = vadd.f32 %v868, %v871
        %vm873 = vweird.f32 %v814
        %vm874 = vweird.f32 %v868
        %vm875 = vmor %vm873, %vm874
        %v876 = vsel %vm875, %v868, %v872
        %v877 = vand.u32 2147483647, %v814
        %vm878 = vcmp.eq.f32.partialorder %v877, 8.507059e+37
        %v879 = vand.u32 %v814, 2147483648
        %v880 = vor.u32 1.1754944e-38, %v879
        %v881 = vsel %vm878, %v880, %v876
        %v882 = vrcp.pop %v817
        %v883 = vmul.f32 %v817, %v882
        %v884 = vsub.f32 1.0, %v883
        %v885 = vmul.f32 %v882, %v884
        %v886 = vadd.f32 %v882, %v885
        %vm887 = vweird.f32 %v817
        %vm888 = vweird.f32 %v882
        %vm889 = vmor %vm887, %vm888
        %v890 = vsel %vm889, %v882, %v886
        %v891 = vand.u32 2147483647, %v817
        %vm892 = vcmp.eq.f32.partialorder %v891, 8.507059e+37
        %v893 = vand.u32 %v817, 2147483648
        %v894 = vor.u32 1.1754944e-38, %v893
        %v895 = vsel %vm892, %v894, %v890
        %v896 = vmul.f32 %v841, %v881
        %v897 = vmul.f32 %v865, %v895
        %v898 = vpack.c.bf16 %v897, %v896
        %v903 = vunpack.c.l.b16 %v419
        %v904 = vunpack.c.l.b16 %v420
        %v905 = vunpack.c.l.b16 %v421
        %v906 = vunpack.c.l.b16 %v422
        %v907 = vpack.c.b16 %v904, %v903
        %v908 = vpack.c.b16 %v906, %v905
        %v912 = vsel %vm616, %v898, 0
        %914 = vmatpush.bf16.msra.mxu0 0
        %915 = vmatpush.bf16.msra.mxu0 0
        %916 = vmatpush.bf16.msra.mxu0 0
        %917 = vmatpush.bf16.msra.mxu0 0
        %918 = vmatpush.bf16.msra.mxu0 0
        %919 = vmatpush.bf16.msra.mxu0 0
        %920 = vmatpush.bf16.msra.mxu0 %v908
        %921 = vmatpush.bf16.msra.mxu0 %v907
        %922 = vmatmul.bf16.gmra.mxu0 %v912
        %v923 = vpop.f32.mrf.mxu0
        %v924 = vadd.f32 0.0, %v923
        %v925 = vpop.f32.mrf.mxu0
        %v926 = vadd.f32 0.0, %v925
        %927 = vdwg.mxu0
        %v932 = vunpack.c.l.b16 %v415
        %v933 = vunpack.c.l.b16 %v416
        %v934 = vunpack.c.l.b16 %v417
        %v935 = vunpack.c.l.b16 %v418
        %v936 = vpack.c.b16 %v933, %v932
        %v937 = vpack.c.b16 %v935, %v934
        %v941 = vsel %vm616, %v747, 0
        %943 = vmatpush.bf16.msra.mxu0 0
        %944 = vmatpush.bf16.msra.mxu0 0
        %945 = vmatpush.bf16.msra.mxu0 0
        %946 = vmatpush.bf16.msra.mxu0 0
        %947 = vmatpush.bf16.msra.mxu0 0
        %948 = vmatpush.bf16.msra.mxu0 0
        %949 = vmatpush.bf16.msra.mxu0 %v937
        %950 = vmatpush.bf16.msra.mxu0 %v936
        %951 = vmatmul.bf16.gmra.mxu0 %v941
        %v952 = vpop.f32.mrf.mxu0
        %v953 = vadd.f32 %v924, %v952
        %v954 = vpop.f32.mrf.mxu0
        %v955 = vadd.f32 %v926, %v954
        %956 = vdwg.mxu0
        %957 = vrot.lane.b32.xlu0 %v610, 64
        %v958 = vpop.permute.xlu0 %957
        %v959 = vrot.slane %v958, 4
        %960 = vrot.lane.b32.xlu0 %v752, 64
        %v961 = vpop.permute.xlu0 %960
        %v963 = vsel %vm616, %v961, 0
        %v966 = vsel %vm616, %v959, 0
        %968 = vmatpush.bf16.xpose.msra.mxu0 0
        %969 = vmatpush.bf16.xpose.msra.mxu0 0
        %970 = vmatpush.bf16.xpose.msra.mxu0 0
        %971 = vmatpush.bf16.xpose.msra.mxu0 0
        %972 = vmatpush.bf16.xpose.msra.mxu0 0
        %973 = vmatpush.bf16.xpose.msra.mxu0 0
        %974 = vmatpush.bf16.xpose.msra.mxu0 0
        %975 = vmatpush.bf16.xpose.msra.mxu0 %v966
        %976 = vmatmul.bf16.gmra.mxu0 %v963
        %v977 = vpop.f32.mrf.mxu0
        %v978 = vadd.f32 0.0, %v977
        %v979 = vpop.f32.mrf.mxu0
        %980 = vdwg.mxu0
        %981 = vrot.lane.b32.xlu0 %v612, 64
        %v982 = vpop.permute.xlu0 %981
        %v983 = vrot.slane %v982, 4
        %984 = vrot.lane.b32.xlu0 %v778, 64
        %v985 = vpop.permute.xlu0 %984
        %v987 = vsel %vm616, %v985, 0
        %v990 = vsel %vm616, %v983, 0
        %992 = vmatpush.bf16.xpose.msra.mxu0 0
        %993 = vmatpush.bf16.xpose.msra.mxu0 0
        %994 = vmatpush.bf16.xpose.msra.mxu0 0
        %995 = vmatpush.bf16.xpose.msra.mxu0 0
        %996 = vmatpush.bf16.xpose.msra.mxu0 0
        %997 = vmatpush.bf16.xpose.msra.mxu0 0
        %998 = vmatpush.bf16.xpose.msra.mxu0 0
        %999 = vmatpush.bf16.xpose.msra.mxu0 %v990
        %1000 = vmatmul.bf16.gmra.mxu0 %v987
        %v1001 = vpop.f32.mrf.mxu0
        %v1002 = vadd.f32 0.0, %v1001
        %v1003 = vpop.f32.mrf.mxu0
        %1004 = vdwg.mxu0
        %v1005 = vsel %vm657, %v978, -inf
        %1006 = vmax.xlane.f32.xlu0 %v1005
        %v1007 = vpop.xlane.xlu0 %1006
        %v1008 = vsel %vm657, %v1002, -inf
        %1009 = vmax.xlane.f32.xlu0 %v1008
        %v1010 = vpop.xlane.xlu0 %1009
        %v1011 = vsub.f32 %v978, %v1007
        %v1012 = vsub.f32 %v1002, %v1010
        %v1013 = vmul.f32 %v1011, 1.442695
        %v1014 = vpow.pop %v1013
        %v1015 = vmul.f32 %v1012, 1.442695
        %v1016 = vpow.pop %v1015
        %v1017 = vsel %vm657, %v1014, 0.0
        %1018 = vadd.xlane.f32.xlu0 %v1017
        %v1019 = vpop.xlane.xlu0 %1018
        %v1020 = vsel %vm657, %v1016, 0.0
        %1021 = vadd.xlane.f32.xlu0 %v1020
        %v1022 = vpop.xlane.xlu0 %1021
        %v1023 = vpack.c.bf16 %v1014, %v1014
        %v1024 = vpack.c.bf16 %v1016, %v1016
        %1025 = vrot.lane.b32.xlu0 %v822, 64
        %v1026 = vpop.permute.xlu0 %1025
        %v1028 = vsel %vm657, %v1023, 0
        %v1031 = vsel %vm681, %v1026, 0
        %1033 = vmatpush.bf16.msra.mxu0 0
        %1034 = vmatpush.bf16.msra.mxu0 0
        %1035 = vmatpush.bf16.msra.mxu0 0
        %1036 = vmatpush.bf16.msra.mxu0 0
        %1037 = vmatpush.bf16.msra.mxu0 0
        %1038 = vmatpush.bf16.msra.mxu0 0
        %1039 = vmatpush.bf16.msra.mxu0 0
        %1040 = vmatpush.bf16.msra.mxu0 %v1031
        %1041 = vmatmul.bf16.gmra.mxu0 %v1028
        %v1042 = vpop.f32.mrf.mxu0
        %v1043 = vadd.f32 0.0, %v1042
        %v1044 = vpop.f32.mrf.mxu0
        %1045 = vdwg.mxu0
        %1046 = vrot.lane.b32.xlu0 %v846, 64
        %v1047 = vpop.permute.xlu0 %1046
        %v1049 = vsel %vm657, %v1024, 0
        %v1052 = vsel %vm681, %v1047, 0
        %1054 = vmatpush.bf16.msra.mxu0 0
        %1055 = vmatpush.bf16.msra.mxu0 0
        %1056 = vmatpush.bf16.msra.mxu0 0
        %1057 = vmatpush.bf16.msra.mxu0 0
        %1058 = vmatpush.bf16.msra.mxu0 0
        %1059 = vmatpush.bf16.msra.mxu0 0
        %1060 = vmatpush.bf16.msra.mxu0 0
        %1061 = vmatpush.bf16.msra.mxu0 %v1052
        %1062 = vmatmul.bf16.gmra.mxu0 %v1049
        %v1063 = vpop.f32.mrf.mxu0
        %v1064 = vadd.f32 0.0, %v1063
        %v1065 = vpop.f32.mrf.mxu0
        %1066 = vdwg.mxu0
        %v1067 = vrcp.pop %v1019
        %v1068 = vmul.f32 %v1019, %v1067
        %v1069 = vsub.f32 1.0, %v1068
        %v1070 = vmul.f32 %v1067, %v1069
        %v1071 = vadd.f32 %v1067, %v1070
        %vm1072 = vweird.f32 %v1019
        %vm1073 = vweird.f32 %v1067
        %vm1074 = vmor %vm1072, %vm1073
        %v1075 = vsel %vm1074, %v1067, %v1071
        %v1076 = vand.u32 2147483647, %v1019
        %vm1077 = vcmp.eq.f32.partialorder %v1076, 8.507059e+37
        %v1078 = vand.u32 %v1019, 2147483648
        %v1079 = vor.u32 1.1754944e-38, %v1078
        %v1080 = vsel %vm1077, %v1079, %v1075
        %v1081 = vrcp.pop %v1022
        %v1082 = vmul.f32 %v1022, %v1081
        %v1083 = vsub.f32 1.0, %v1082
        %v1084 = vmul.f32 %v1081, %v1083
        %v1085 = vadd.f32 %v1081, %v1084
        %vm1086 = vweird.f32 %v1022
        %vm1087 = vweird.f32 %v1081
        %vm1088 = vmor %vm1086, %vm1087
        %v1089 = vsel %vm1088, %v1081, %v1085
        %v1090 = vand.u32 2147483647, %v1022
        %vm1091 = vcmp.eq.f32.partialorder %v1090, 8.507059e+37
        %v1092 = vand.u32 %v1022, 2147483648
        %v1093 = vor.u32 1.1754944e-38, %v1092
        %v1094 = vsel %vm1091, %v1093, %v1089
        %v1095 = vmul.f32 %v1043, %v1080
        %v1096 = vmul.f32 %v1064, %v1094
        %v1097 = vpack.c.bf16 %v1096, %v1095
        %v1102 = vunpack.c.l.b16 %v423
        %v1103 = vunpack.c.l.b16 %v424
        %v1104 = vunpack.c.l.b16 %v425
        %v1105 = vunpack.c.l.b16 %v426
        %v1106 = vpack.c.b16 %v1103, %v1102
        %v1107 = vpack.c.b16 %v1105, %v1104
        %v1111 = vsel %vm616, %v1097, 0
        %1113 = vmatpush.bf16.msra.mxu0 0
        %1114 = vmatpush.bf16.msra.mxu0 0
        %1115 = vmatpush.bf16.msra.mxu0 0
        %1116 = vmatpush.bf16.msra.mxu0 0
        %1117 = vmatpush.bf16.msra.mxu0 0
        %1118 = vmatpush.bf16.msra.mxu0 0
        %1119 = vmatpush.bf16.msra.mxu0 %v1107
        %1120 = vmatpush.bf16.msra.mxu0 %v1106
        %1121 = vmatmul.bf16.gmra.mxu0 %v1111
        %v1122 = vpop.f32.mrf.mxu0
        %v1123 = vadd.f32 0.0, %v1122
        %v1124 = vpop.f32.mrf.mxu0
        %v1125 = vadd.f32 0.0, %v1124
        %1126 = vdwg.mxu0
        %v1127 = vadd.f32 %v953, %v1123
        %v1128 = vadd.f32 %v955, %v1125
        %1129 = vrot.lane.b32.xlu0 %v610, 32
        %v1130 = vpop.permute.xlu0 %1129
        %v1131 = vrot.slane %v1130, 4
        %1132 = vrot.lane.b32.xlu0 %v752, 32
        %v1133 = vpop.permute.xlu0 %1132
        %v1135 = vsel %vm616, %v1133, 0
        %v1138 = vsel %vm616, %v1131, 0
        %1140 = vmatpush.bf16.xpose.msra.mxu0 0
        %1141 = vmatpush.bf16.xpose.msra.mxu0 0
        %1142 = vmatpush.bf16.xpose.msra.mxu0 0
        %1143 = vmatpush.bf16.xpose.msra.mxu0 0
        %1144 = vmatpush.bf16.xpose.msra.mxu0 0
        %1145 = vmatpush.bf16.xpose.msra.mxu0 0
        %1146 = vmatpush.bf16.xpose.msra.mxu0 0
        %1147 = vmatpush.bf16.xpose.msra.mxu0 %v1138
        %1148 = vmatmul.bf16.gmra.mxu0 %v1135
        %v1149 = vpop.f32.mrf.mxu0
        %v1150 = vadd.f32 0.0, %v1149
        %v1151 = vpop.f32.mrf.mxu0
        %1152 = vdwg.mxu0
        %1153 = vrot.lane.b32.xlu0 %v612, 32
        %v1154 = vpop.permute.xlu0 %1153
        %v1155 = vrot.slane %v1154, 4
        %1156 = vrot.lane.b32.xlu0 %v778, 32
        %v1157 = vpop.permute.xlu0 %1156
        %v1159 = vsel %vm616, %v1157, 0
        %v1162 = vsel %vm616, %v1155, 0
        %1164 = vmatpush.bf16.xpose.msra.mxu0 0
        %1165 = vmatpush.bf16.xpose.msra.mxu0 0
        %1166 = vmatpush.bf16.xpose.msra.mxu0 0
        %1167 = vmatpush.bf16.xpose.msra.mxu0 0
        %1168 = vmatpush.bf16.xpose.msra.mxu0 0
        %1169 = vmatpush.bf16.xpose.msra.mxu0 0
        %1170 = vmatpush.bf16.xpose.msra.mxu0 0
        %1171 = vmatpush.bf16.xpose.msra.mxu0 %v1162
        %1172 = vmatmul.bf16.gmra.mxu0 %v1159
        %v1173 = vpop.f32.mrf.mxu0
        %v1174 = vadd.f32 0.0, %v1173
        %v1175 = vpop.f32.mrf.mxu0
        %1176 = vdwg.mxu0
        %v1177 = vsel %vm657, %v1150, -inf
        %1178 = vmax.xlane.f32.xlu0 %v1177
        %v1179 = vpop.xlane.xlu0 %1178
        %v1180 = vsel %vm657, %v1174, -inf
        %1181 = vmax.xlane.f32.xlu0 %v1180
        %v1182 = vpop.xlane.xlu0 %1181
        %v1183 = vsub.f32 %v1150, %v1179
        %v1184 = vsub.f32 %v1174, %v1182
        %v1185 = vmul.f32 %v1183, 1.442695
        %v1186 = vpow.pop %v1185
        %v1187 = vmul.f32 %v1184, 1.442695
        %v1188 = vpow.pop %v1187
        %v1189 = vsel %vm657, %v1186, 0.0
        %1190 = vadd.xlane.f32.xlu0 %v1189
        %v1191 = vpop.xlane.xlu0 %1190
        %v1192 = vsel %vm657, %v1188, 0.0
        %1193 = vadd.xlane.f32.xlu0 %v1192
        %v1194 = vpop.xlane.xlu0 %1193
        %v1195 = vpack.c.bf16 %v1186, %v1186
        %v1196 = vpack.c.bf16 %v1188, %v1188
        %1197 = vrot.lane.b32.xlu0 %v822, 32
        %v1198 = vpop.permute.xlu0 %1197
        %v1200 = vsel %vm657, %v1195, 0
        %v1203 = vsel %vm681, %v1198, 0
        %1205 = vmatpush.bf16.msra.mxu0 0
        %1206 = vmatpush.bf16.msra.mxu0 0
        %1207 = vmatpush.bf16.msra.mxu0 0
        %1208 = vmatpush.bf16.msra.mxu0 0
        %1209 = vmatpush.bf16.msra.mxu0 0
        %1210 = vmatpush.bf16.msra.mxu0 0
        %1211 = vmatpush.bf16.msra.mxu0 0
        %1212 = vmatpush.bf16.msra.mxu0 %v1203
        %1213 = vmatmul.bf16.gmra.mxu0 %v1200
        %v1214 = vpop.f32.mrf.mxu0
        %v1215 = vadd.f32 0.0, %v1214
        %v1216 = vpop.f32.mrf.mxu0
        %1217 = vdwg.mxu0
        %1218 = vrot.lane.b32.xlu0 %v846, 32
        %v1219 = vpop.permute.xlu0 %1218
        %v1221 = vsel %vm657, %v1196, 0
        %v1224 = vsel %vm681, %v1219, 0
        %1226 = vmatpush.bf16.msra.mxu0 0
        %1227 = vmatpush.bf16.msra.mxu0 0
        %1228 = vmatpush.bf16.msra.mxu0 0
        %1229 = vmatpush.bf16.msra.mxu0 0
        %1230 = vmatpush.bf16.msra.mxu0 0
        %1231 = vmatpush.bf16.msra.mxu0 0
        %1232 = vmatpush.bf16.msra.mxu0 0
        %1233 = vmatpush.bf16.msra.mxu0 %v1224
        %1234 = vmatmul.bf16.gmra.mxu0 %v1221
        %v1235 = vpop.f32.mrf.mxu0
        %v1236 = vadd.f32 0.0, %v1235
        %v1237 = vpop.f32.mrf.mxu0
        %1238 = vdwg.mxu0
        %v1239 = vrcp.pop %v1191
        %v1240 = vmul.f32 %v1191, %v1239
        %v1241 = vsub.f32 1.0, %v1240
        %v1242 = vmul.f32 %v1239, %v1241
        %v1243 = vadd.f32 %v1239, %v1242
        %vm1244 = vweird.f32 %v1191
        %vm1245 = vweird.f32 %v1239
        %vm1246 = vmor %vm1244, %vm1245
        %v1247 = vsel %vm1246, %v1239, %v1243
        %v1248 = vand.u32 2147483647, %v1191
        %vm1249 = vcmp.eq.f32.partialorder %v1248, 8.507059e+37
        %v1250 = vand.u32 %v1191, 2147483648
        %v1251 = vor.u32 1.1754944e-38, %v1250
        %v1252 = vsel %vm1249, %v1251, %v1247
        %v1253 = vrcp.pop %v1194
        %v1254 = vmul.f32 %v1194, %v1253
        %v1255 = vsub.f32 1.0, %v1254
        %v1256 = vmul.f32 %v1253, %v1255
        %v1257 = vadd.f32 %v1253, %v1256
        %vm1258 = vweird.f32 %v1194
        %vm1259 = vweird.f32 %v1253
        %vm1260 = vmor %vm1258, %vm1259
        %v1261 = vsel %vm1260, %v1253, %v1257
        %v1262 = vand.u32 2147483647, %v1194
        %vm1263 = vcmp.eq.f32.partialorder %v1262, 8.507059e+37
        %v1264 = vand.u32 %v1194, 2147483648
        %v1265 = vor.u32 1.1754944e-38, %v1264
        %v1266 = vsel %vm1263, %v1265, %v1261
        %v1267 = vmul.f32 %v1215, %v1252
        %v1268 = vmul.f32 %v1236, %v1266
        %v1269 = vpack.c.bf16 %v1268, %v1267
        %v1274 = vunpack.c.l.b16 %v427
        %v1275 = vunpack.c.l.b16 %v428
        %v1276 = vunpack.c.l.b16 %v429
        %v1277 = vunpack.c.l.b16 %v430
        %v1278 = vpack.c.b16 %v1275, %v1274
        %v1279 = vpack.c.b16 %v1277, %v1276
        %v1283 = vsel %vm616, %v1269, 0
        %1285 = vmatpush.bf16.msra.mxu0 0
        %1286 = vmatpush.bf16.msra.mxu0 0
        %1287 = vmatpush.bf16.msra.mxu0 0
        %1288 = vmatpush.bf16.msra.mxu0 0
        %1289 = vmatpush.bf16.msra.mxu0 0
        %1290 = vmatpush.bf16.msra.mxu0 0
        %1291 = vmatpush.bf16.msra.mxu0 %v1279
        %1292 = vmatpush.bf16.msra.mxu0 %v1278
        %1293 = vmatmul.bf16.gmra.mxu0 %v1283
        %v1294 = vpop.f32.mrf.mxu0
        %v1295 = vadd.f32 0.0, %v1294
        %v1296 = vpop.f32.mrf.mxu0
        %v1297 = vadd.f32 0.0, %v1296
        %1298 = vdwg.mxu0
        %v1299 = vadd.f32 %v1127, %v1295
        %v1300 = vadd.f32 %v1128, %v1297
        %v1302 = vperm.slane %v431, 0
        %v1304 = vadd.f32 %v1299, %v1302
        %v1305 = vadd.f32 %v1300, %v1302
        %1306 = vst [vmem:[%s375] sm:$0xff] %v1304
        %1307 = vst [vmem:[%s375 + $0x8] sm:$0xff] %v1305
        %s1308 = sand.u32 %s166, 1
        %s1309 = scalar_lea.sflag [#allocation4], %s1308
        %s1310 = sand.u32 %s166, 1
        %s1311 = smul.addr %s1310, 16
        %s1312 = scalar_lea.vmem [#allocation10], %s1311
        // Predicated region
        $region57: #{tpu_custom_call.1} parent=39 // pred_check
          %p1313 = pneg %p176
        $region58: #{tpu_custom_call.1} parent=39 // pred_check_branch
          %1315 = sbr.rel (%p1313) target = $region60
        $region59: #{tpu_custom_call.1} parent=39 // pred_region
          %1317 = vsyncadd %s1309, 0
          %s1318 = smul.addr %s28, 2
          %s1319 = smul.addr %s1318, 8
          %s1320 = scalar_lea.hbm %s5, %s1319
          %s1321 = sshll.u32 %s1312, 4
          %s1322 = int_to_ptr.vmem [resolvable:$true] %s1321
          %s1323 = sshll.u32 %s1320, 4
          %s1324 = int_to_ptr.hbm [resolvable:$true] %s1323
          %1329 = dma.vmem_to_hbm [thread:$0]  %s1322, 256, %s1324, %s1309, 128, 128, 8
        $region60: #{tpu_custom_call.1} parent=39 // pred_fallthru
          _
      $region40: #{tpu_custom_call.1} parent=5 // pred_fallthru
        _
      %p1330 = scmp.le.s32.totalorder 2, %s23
      // Predicated region
      $region61: #{tpu_custom_call.1} parent=5 // pred_check
        %p1331 = pneg %p1330
      $region62: #{tpu_custom_call.1} parent=5 // pred_check_branch
        %1333 = sbr.rel (%p1331) target = $region64
      $region63: #{tpu_custom_call.1} parent=5 // pred_region
        %s1334 = ssub.s32 %s23, 2
        // Predicated region
        $region65: #{tpu_custom_call.1} parent=63 // pred_check
          %p1335 = pneg %p182
        $region66: #{tpu_custom_call.1} parent=63 // pred_check_branch
          %1337 = sbr.rel (%p1335) target = $region68
        $region67: #{tpu_custom_call.1} parent=63 // pred_region
          %s1338 = sand.u32 %s167, 1
          %s1339 = scalar_lea.sflag [#allocation4], %s1338
          %s1340 = sand.u32 %s167, 1
          %s1341 = smul.addr %s1340, 16
          %s1342 = scalar_lea.vmem [#allocation10], %s1341
          %1344 = dma.done %s1339, 256
        $region68: #{tpu_custom_call.1} parent=63 // pred_fallthru
          _
      $region64: #{tpu_custom_call.1} parent=5 // pred_fallthru
        _
    $region6: #{tpu_custom_call.1} parent=1 // loop_footer
      %s27 = sadd.s32 1, %s23
    $region7: #{tpu_custom_call.1} parent=1 // loop_footer_branch
      %22 = sbr.rel target = $region3
    $region8: #{tpu_custom_call.1} parent=1 // loop_exit
      _
    %1345 = vsyncpa [#allocation3], 1
    %s1346 = scalar_lea.sflag [#allocation3], 1
    %1347 = vsyncpa %s1346, 1
    %1348 = vsyncpa [#allocation6], 1
    %s1349 = scalar_lea.sflag [#allocation6], 1
    %1350 = vsyncpa %s1349, 1
    %1351 = vsyncpa [#allocation9], 1
    %s1352 = scalar_lea.sflag [#allocation9], 1
    %1353 = vsyncpa %s1352, 1
    %1354 = vsyncpa [#allocation4], 1
    %s1355 = scalar_lea.sflag [#allocation4], 1
    %1356 = vsyncpa %s1355, 1

</llo_original>
